<compile_context>
chip_gen: v5e
topology: v5e:2x2
jax: 0.10.0
libtpu: 0.0.40
codegen_flags: <defaults>
</compile_context>

<pallas_src>
import functools
import math

import jax
import jax.numpy as jnp
from jax import lax
from jax.experimental import pallas as pl
from jax.experimental.pallas import tpu as pltpu


# Tile caps (multiples of (8, 128)); sized so double-buffered bf16 blocks stay
# well inside v7x's 64 MiB VMEM.  On v5e/v6e (128 MiB) _TM could be raised to
# 512 for large M.
_TM, _TN, _TK, _TF = 256, 512, 512, 512
_VMEM_LIMIT = 48 * 1024 * 1024   # safe on all of v5e / v6e / v7x


def _tile(dim, cap):
    """Use the full dim when small, else the cap (which must divide it)."""
    if dim <= cap:
        return dim
    assert dim % cap == 0, f"dim {dim} must be a multiple of tile cap {cap}"
    return cap


def _itemsize(x):
    return jnp.dtype(x.dtype).itemsize


# --------------------------- tiled matmul + bias ----------------------------

def _matmul_bias_kernel(x_ref, w_ref, b_ref, o_ref, acc_ref, *, relu):
    k = pl.program_id(2)

    @pl.when(k == 0)
    def _():
        acc_ref[...] = jnp.zeros_like(acc_ref)

    acc_ref[...] += jnp.dot(x_ref[...], w_ref[...],
                            preferred_element_type=jnp.float32)

    @pl.when(k == pl.num_programs(2) - 1)
    def _():
        y = acc_ref[...] + b_ref[...].astype(jnp.float32)
        if relu:
            y = jnp.maximum(y, 0.0)
        o_ref[...] = y.astype(o_ref.dtype)


def matmul_bias(x, w, b, relu=False):
    """x: [M, K] bf16, w: [K, N] bf16, b: [1, N] f32 -> [M, N] (x.dtype)."""
    M, K = x.shape
    N = w.shape[1]
    tm, tn, tk = _tile(M, _TM), _tile(N, _TN), _tile(K, _TK)
    cost = pl.CostEstimate(
        flops=2 * M * N * K,
        transcendentals=0,
        bytes_accessed=(M * K * _itemsize(x) + K * N * _itemsize(w)
                        + N * _itemsize(b) + M * N * _itemsize(x)))
    return pl.pallas_call(
        functools.partial(_matmul_bias_kernel, relu=relu),
        out_shape=jax.ShapeDtypeStruct((M, N), x.dtype),
        grid=(M // tm, N // tn, K // tk),
        in_specs=[
            pl.BlockSpec((tm, tk), lambda i, j, k: (i, k)),
            pl.BlockSpec((tk, tn), lambda i, j, k: (k, j)),
            pl.BlockSpec((1, tn), lambda i, j, k: (0, j)),
        ],
        out_specs=pl.BlockSpec((tm, tn), lambda i, j, k: (i, j)),
        scratch_shapes=[pltpu.VMEM((tm, tn), jnp.float32)],
        compiler_params=pltpu.CompilerParams(
            dimension_semantics=("parallel", "parallel", "arbitrary")),
        cost_estimate=cost,
    )(x, w, b)


# ------------------- tiled matmul + bias + residual + LN --------------------

def _matmul_res_ln_kernel(x_ref, w_ref, b_ref, r_ref, g_ref, bb_ref,
                          o_ref, acc_ref, *, eps):
    k = pl.program_id(1)

    @pl.when(k == 0)
    def _():
        acc_ref[...] = jnp.zeros_like(acc_ref)

    acc_ref[...] += jnp.dot(x_ref[...], w_ref[...],
                            preferred_element_type=jnp.float32)

    @pl.when(k == pl.num_programs(1) - 1)
    def _():
        y = (acc_ref[...] + b_ref[...].astype(jnp.float32)
             + r_ref[...].astype(jnp.float32))
        # single-pass LayerNorm: var = E[y^2] - mu^2
        mu = jnp.mean(y, axis=-1, keepdims=True)
        ms = jnp.mean(y * y, axis=-1, keepdims=True)
        inv = lax.rsqrt(ms - mu * mu + eps)
        o_ref[...] = ((y - mu) * inv * g_ref[...].astype(jnp.float32)
                      + bb_ref[...].astype(jnp.float32)).astype(o_ref.dtype)


def matmul_residual_layernorm(x, w, b, residual, gamma, beta,
                              eps=1e-5, out_dtype=None):
    """LayerNorm(x @ w + b + residual).  N (= d_model) is kept untiled so the
    LayerNorm row reduction happens in the matmul epilogue."""
    M, K = x.shape
    N = w.shape[1]
    out_dtype = out_dtype or x.dtype
    tm, tk = _tile(M, _TM), _tile(K, _TK)
    cost = pl.CostEstimate(
        flops=2 * M * N * K + 8 * M * N,
        transcendentals=M,   # rsqrt per row
        bytes_accessed=(M * K * _itemsize(x) + K * N * _itemsize(w)
                        + 2 * M * N * _itemsize(x)
                        + M * N * jnp.dtype(out_dtype).itemsize))
    return pl.pallas_call(
        functools.partial(_matmul_res_ln_kernel, eps=eps),
        out_shape=jax.ShapeDtypeStruct((M, N), out_dtype),
        grid=(M // tm, K // tk),
        in_specs=[
            pl.BlockSpec((tm, tk), lambda i, k: (i, k)),
            pl.BlockSpec((tk, N), lambda i, k: (k, 0)),
            pl.BlockSpec((1, N), lambda i, k: (0, 0)),
            pl.BlockSpec((tm, N), lambda i, k: (i, 0)),
            pl.BlockSpec((1, N), lambda i, k: (0, 0)),
            pl.BlockSpec((1, N), lambda i, k: (0, 0)),
        ],
        out_specs=pl.BlockSpec((tm, N), lambda i, k: (i, 0)),
        scratch_shapes=[pltpu.VMEM((tm, N), jnp.float32)],
        compiler_params=pltpu.CompilerParams(
            dimension_semantics=("parallel", "arbitrary"),
            vmem_limit_bytes=_VMEM_LIMIT),
        cost_estimate=cost,
    )(x, w, b, residual, gamma, beta)


# ------------------ fused FFN (W1+ReLU+W2) + residual + LN ------------------

def _ffn_res_ln_kernel(x_ref, w1_ref, b1_ref, w2_ref, b2_ref, r_ref,
                       g_ref, bb_ref, o_ref, acc_ref, *, eps):
    f = pl.program_id(1)

    @pl.when(f == 0)
    def _():
        acc_ref[...] = jnp.zeros_like(acc_ref)

    h = jnp.dot(x_ref[...], w1_ref[...], preferred_element_type=jnp.float32)
    h = jnp.maximum(h + b1_ref[...].astype(jnp.float32), 0.0)
    # deliberate numerics choice: hidden activations quantized to bf16 before
    # the second MXU dot; the accumulator stays f32.
    acc_ref[...] += jnp.dot(h.astype(x_ref.dtype), w2_ref[...],
                            preferred_element_type=jnp.float32)

    @pl.when(f == pl.num_programs(1) - 1)
    def _():
        y = (acc_ref[...] + b2_ref[...].astype(jnp.float32)
             + r_ref[...].astype(jnp.float32))
        mu = jnp.mean(y, axis=-1, keepdims=True)
        ms = jnp.mean(y * y, axis=-1, keepdims=True)
        inv = lax.rsqrt(ms - mu * mu + eps)
        o_ref[...] = ((y - mu) * inv * g_ref[...].astype(jnp.float32)
                      + bb_ref[...].astype(jnp.float32)).astype(o_ref.dtype)


def ffn_residual_layernorm(x, w1, b1, w2, b2, residual, gamma, beta,
                           eps=1e-5, out_dtype=None):
    """LayerNorm(residual + ReLU(x @ w1 + b1) @ w2 + b2), tiled over d_ff."""
    M, D = x.shape
    F = w1.shape[1]
    out_dtype = out_dtype or x.dtype
    tm, tf = _tile(M, _TM), _tile(F, _TF)
    cost = pl.CostEstimate(
        flops=4 * M * F * D + 8 * M * D,
        transcendentals=M,
        bytes_accessed=(M * D * _itemsize(x) + 2 * F * D * _itemsize(w1)
                        + 2 * M * D * _itemsize(x)
                        + M * D * jnp.dtype(out_dtype).itemsize))
    return pl.pallas_call(
        functools.partial(_ffn_res_ln_kernel, eps=eps),
        out_shape=jax.ShapeDtypeStruct((M, D), out_dtype),
        grid=(M // tm, F // tf),
        in_specs=[
            pl.BlockSpec((tm, D), lambda i, f: (i, 0)),
            pl.BlockSpec((D, tf), lambda i, f: (0, f)),
            pl.BlockSpec((1, tf), lambda i, f: (0, f)),
            pl.BlockSpec((tf, D), lambda i, f: (f, 0)),
            pl.BlockSpec((1, D), lambda i, f: (0, 0)),
            pl.BlockSpec((tm, D), lambda i, f: (i, 0)),
            pl.BlockSpec((1, D), lambda i, f: (0, 0)),
            pl.BlockSpec((1, D), lambda i, f: (0, 0)),
        ],
        out_specs=pl.BlockSpec((tm, D), lambda i, f: (i, 0)),
        scratch_shapes=[pltpu.VMEM((tm, D), jnp.float32)],
        compiler_params=pltpu.CompilerParams(
            dimension_semantics=("parallel", "arbitrary"),
            vmem_limit_bytes=_VMEM_LIMIT),
        cost_estimate=cost,
    )(x, w1, b1, w2, b2, residual, gamma, beta)


# ------------------------- multi-head attention -----------------------------
# Heads are split in the wrapper ([B, H, S, Dh] layout, one cheap XLA
# transpose each way); the kernel handles exactly one (batch, head) pair per
# grid step with plain 2-D MXU dots -- no per-head Python loop, no lane-axis
# slicing, no concatenate.  The (B, H) grid is fully parallel (feeds both
# TensorCores on v7x).

def _attn_head_kernel(q_ref, k_ref, v_ref, o_ref, *, causal, scale):
    q = q_ref[...]                             # (Sq, Dh) bf16
    k = k_ref[...]                             # (Skv, Dh) bf16
    v = v_ref[...]                             # (Skv, Dh) bf16
    # (Sq, Dh) x (Skv, Dh) -> (Sq, Skv), f32 accumulation; scale in f32.
    s = lax.dot_general(q, k, (((1,), (1,)), ((), ())),
                        preferred_element_type=jnp.float32) * scale
    if causal:
        Sq, Skv = s.shape
        row = lax.broadcasted_iota(jnp.int32, (Sq, Skv), 0)
        col = lax.broadcasted_iota(jnp.int32, (Sq, Skv), 1)
        s = jnp.where(row >= col, s, -1e30)
    m = jnp.max(s, axis=-1, keepdims=True)
    p = jnp.exp(s - m)
    l = jnp.sum(p, axis=-1, keepdims=True)
    o = jnp.dot(p.astype(v.dtype), v, preferred_element_type=jnp.float32)
    o_ref[...] = (o / l).astype(o_ref.dtype)   # exact normalization


def multi_head_attention(q, k, v, num_heads, causal):
    """q: [B, Sq, D], k/v: [B, Skv, D] -> [B, Sq, D]."""
    B, Sq, D = q.shape
    Bk, Skv, Dk = k.shape
    assert B == Bk and D == Dk, "memory batch/width must match query"
    assert D % num_heads == 0
    Dh = D // num_heads
    scale = 1.0 / math.sqrt(Dh)

    def split_heads(t, S):
        return t.reshape(B, S, num_heads, Dh).transpose(0, 2, 1, 3)

    qh = split_heads(q, Sq)
    kh = split_heads(k, Skv)
    vh = split_heads(v, Skv)

    cost = pl.CostEstimate(
        flops=4 * B * num_heads * Sq * Skv * Dh,
        transcendentals=B * num_heads * Sq * Skv,
        bytes_accessed=(B * num_heads * (Sq + 2 * Skv) * Dh * _itemsize(q)
                        + B * num_heads * Sq * Dh * _itemsize(q)))

    out = pl.pallas_call(
        functools.partial(_attn_head_kernel, causal=causal, scale=scale),
        out_shape=jax.ShapeDtypeStruct((B, num_heads, Sq, Dh), q.dtype),
        grid=(B, num_heads),
        in_specs=[
            pl.BlockSpec((None, None, Sq, Dh), lambda b, h: (b, h, 0, 0)),
            pl.BlockSpec((None, None, Skv, Dh), lambda b, h: (b, h, 0, 0)),
            pl.BlockSpec((None, None, Skv, Dh), lambda b, h: (b, h, 0, 0)),
        ],
        out_specs=pl.BlockSpec((None, None, Sq, Dh), lambda b, h: (b, h, 0, 0)),
        compiler_params=pltpu.CompilerParams(
            dimension_semantics=("parallel", "parallel")),
        cost_estimate=cost,
    )(qh, kh, vh)
    # merge heads back: [B, H, Sq, Dh] -> [B, Sq, D]
    return out.transpose(0, 2, 1, 3).reshape(B, Sq, D)


# ------------------------------ module glue ---------------------------------

def init_params(key, d_model, d_ff):
    ks = jax.random.split(key, 7)

    def w(k, i, o):
        # weights stored in bf16 (MXU-native); biases / LN params stay f32
        return (jax.random.normal(k, (i, o), jnp.float32) * 0.02
                ).astype(jnp.bfloat16)

    p = {
        "wqkv": w(ks[0], d_model, 3 * d_model),
        "bqkv": jnp.zeros((1, 3 * d_model), jnp.float32),
        "wo1": w(ks[1], d_model, d_model),
        "bo1": jnp.zeros((1, d_model), jnp.float32),
        "wq2": w(ks[2], d_model, d_model),
        "bq2": jnp.zeros((1, d_model), jnp.float32),
        "wkv2": w(ks[3], d_model, 2 * d_model),
        "bkv2": jnp.zeros((1, 2 * d_model), jnp.float32),
        "wo2": w(ks[4], d_model, d_model),
        "bo2": jnp.zeros((1, d_model), jnp.float32),
        "w1": w(ks[5], d_model, d_ff),
        "b1": jnp.zeros((1, d_ff), jnp.float32),
        "w2": w(ks[6], d_ff, d_model),
        "b2": jnp.zeros((1, d_model), jnp.float32),
        # single shared LayerNorm (the PyTorch module reuses self.layer_norm 3x)
        "ln_g": jnp.ones((1, d_model), jnp.float32),
        "ln_b": jnp.zeros((1, d_model), jnp.float32),
    }
    return p


def transformer_decoder_unit(embeddings, memory, params, num_heads):
    B, S, D = embeddings.shape
    Bm, Sm, Dm = memory.shape
    assert B == Bm and D == Dm, "memory batch / width must match embeddings"

    cdt = jnp.bfloat16
    x2 = embeddings.astype(cdt).reshape(B * S, D)
    mem2 = memory.astype(cdt).reshape(Bm * Sm, D)
    g, bb = params["ln_g"], params["ln_b"]

    # 1) masked self-attention block
    qkv = matmul_bias(x2, params["wqkv"], params["bqkv"])            # [M, 3D] bf16
    qkv = qkv.reshape(B, S, 3 * D)
    q1, k1, v1 = qkv[..., :D], qkv[..., D:2 * D], qkv[..., 2 * D:]
    att = multi_head_attention(q1, k1, v1, num_heads, causal=True)   # [B, S, D]
    out1 = matmul_residual_layernorm(att.reshape(B * S, D),
                                     params["wo1"], params["bo1"],
                                     x2, g, bb)                       # bf16

    # 2) cross-attention block against memory
    q2 = matmul_bias(out1, params["wq2"], params["bq2"])              # [M, D]
    kv2 = matmul_bias(mem2, params["wkv2"], params["bkv2"])           # [Mm, 2D]
    kv2 = kv2.reshape(Bm, Sm, 2 * D)
    mk, mv = kv2[..., :D], kv2[..., D:]
    xatt = multi_head_attention(q2.reshape(B, S, D), mk, mv, num_heads,
                                causal=False)
    out2 = matmul_residual_layernorm(xatt.reshape(B * S, D),
                                     params["wo2"], params["bo2"],
                                     out1, g, bb)                     # bf16

    # 3) feed-forward block (W1 + ReLU + W2 + residual + LN, one kernel)
    out3 = ffn_residual_layernorm(out2, params["w1"], params["b1"],
                                  params["w2"], params["b2"],
                                  out2, g, bb, out_dtype=jnp.float32)
    return out3.reshape(B, S, D)


if __name__ == "__main__":
    B, S, S_mem = 2, 8, 8
    d_model, num_heads, d_ff = 32, 8, 64

    key = jax.random.PRNGKey(0)
    k_emb, k_mem, k_par = jax.random.split(key, 3)
    embeddings = jax.random.normal(k_emb, (B, S, d_model), jnp.float32)
    memory = jax.random.normal(k_mem, (B, S_mem, d_model), jnp.float32)
    params = init_params(k_par, d_model, d_ff)

    fwd = jax.jit(transformer_decoder_unit, static_argnames=("num_heads",))
    out = fwd(embeddings, memory, params, num_heads=num_heads)
    out = jax.block_until_ready(out)
    assert out.shape == (B, S, d_model) and out.dtype == jnp.float32
    assert bool(jnp.all(jnp.isfinite(out)))
    print("KERNEL_OK")
</pallas_src>

<mosaic_0001>
module attributes {stable_mosaic.version = 11 : i64} {
  func.func @_matmul_bias_kernel(%arg0: i32, %arg1: i32, %arg2: i32, %arg3: memref<16x32xbf16, #tpu.memory_space<vmem>>, %arg4: memref<32x96xbf16, #tpu.memory_space<vmem>>, %arg5: memref<1x96xf32, #tpu.memory_space<vmem>>, %arg6: memref<16x96xbf16, #tpu.memory_space<vmem>>, %arg7: memref<16x96xf32, #tpu.memory_space<vmem>>) attributes {dimension_semantics = [#tpu.dimension_semantics<parallel>, #tpu.dimension_semantics<parallel>, #tpu.dimension_semantics<arbitrary>], iteration_bounds = array<i64: 1, 1, 1>, scalar_prefetch = 0 : i64, scratch_operands = 1 : i64, tpu.core_type = #tpu.core_type<tc>, window_params = [{transform_indices = @transform_0, window_bounds = array<i64: 16, 32>}, {transform_indices = @transform_1, window_bounds = array<i64: 32, 96>}, {transform_indices = @transform_2, window_bounds = array<i64: 1, 96>}, {transform_indices = @transform_3, window_bounds = array<i64: 16, 96>}]} {
    %c0_i32 = arith.constant 0 : i32
    %0 = arith.cmpi eq, %arg2, %c0_i32 : i32
    %1 = arith.extui %0 : i1 to i32
    %c0_i32_0 = arith.constant 0 : i32
    %2 = arith.cmpi ne, %1, %c0_i32_0 : i32
    scf.if %2 {
      %cst_10 = arith.constant 0.000000e+00 : f32
      %12 = vector.broadcast %cst_10 : f32 to vector<16x96xf32>
      %c0_11 = arith.constant 0 : index
      %c0_12 = arith.constant 0 : index
      %13 = vector.load %arg7[%c0_11, %c0_12] : memref<16x96xf32, #tpu.memory_space<vmem>>, vector<16x96xf32>
      tpu.vector_store %arg7[%c0_11, %c0_12], %12 {strides = array<i32>} : memref<16x96xf32, #tpu.memory_space<vmem>>, vector<16x96xf32>,
    } else {
    }
    %c0 = arith.constant 0 : index
    %c0_1 = arith.constant 0 : index
    %3 = vector.load %arg7[%c0, %c0_1] : memref<16x96xf32, #tpu.memory_space<vmem>>, vector<16x96xf32>
    %c0_2 = arith.constant 0 : index
    %c0_3 = arith.constant 0 : index
    %4 = vector.load %arg3[%c0_2, %c0_3] : memref<16x32xbf16, #tpu.memory_space<vmem>>, vector<16x32xbf16>
    %c0_4 = arith.constant 0 : index
    %c0_5 = arith.constant 0 : index
    %5 = vector.load %arg4[%c0_4, %c0_5] : memref<32x96xbf16, #tpu.memory_space<vmem>>, vector<32x96xbf16>
    %cst = arith.constant dense<0.000000e+00> : vector<16x96xf32>
    %6 = tpu.matmul %4, %5, %cst {dimension_numbers = #tpu.dot_dimension_numbers<[1], [0], [0], [1], [0, 0, 1, 1], [], []>} : vector<16x32xbf16>, vector<32x96xbf16>, vector<16x96xf32> -> vector<16x96xf32>
    %7 = arith.addf %3, %6 : vector<16x96xf32>
    %c0_6 = arith.constant 0 : index
    %c0_7 = arith.constant 0 : index
    %8 = vector.load %arg7[%c0_6, %c0_7] : memref<16x96xf32, #tpu.memory_space<vmem>>, vector<16x96xf32>
    tpu.vector_store %arg7[%c0_6, %c0_7], %7 {strides = array<i32>} : memref<16x96xf32, #tpu.memory_space<vmem>>, vector<16x96xf32>,
    %c0_i32_8 = arith.constant 0 : i32
    %9 = arith.cmpi eq, %arg2, %c0_i32_8 : i32
    %10 = arith.extui %9 : i1 to i32
    %c0_i32_9 = arith.constant 0 : i32
    %11 = arith.cmpi ne, %10, %c0_i32_9 : i32
    scf.if %11 {
      %c0_10 = arith.constant 0 : index
      %c0_11 = arith.constant 0 : index
      %12 = vector.load %arg7[%c0_10, %c0_11] : memref<16x96xf32, #tpu.memory_space<vmem>>, vector<16x96xf32>
      %c0_12 = arith.constant 0 : index
      %c0_13 = arith.constant 0 : index
      %13 = vector.load %arg5[%c0_12, %c0_13] : memref<1x96xf32, #tpu.memory_space<vmem>>, vector<1x96xf32>
      %14 = vector.broadcast %13 : vector<1x96xf32> to vector<16x96xf32>
      %15 = arith.addf %12, %14 : vector<16x96xf32>
      %16 = arith.truncf %15 : vector<16x96xf32> to vector<16x96xbf16>
      %c0_14 = arith.constant 0 : index
      %c0_15 = arith.constant 0 : index
      %17 = vector.load %arg6[%c0_14, %c0_15] : memref<16x96xbf16, #tpu.memory_space<vmem>>, vector<16x96xbf16>
      tpu.vector_store %arg6[%c0_14, %c0_15], %16 {strides = array<i32>} : memref<16x96xbf16, #tpu.memory_space<vmem>>, vector<16x96xbf16>,
    } else {
    }
    return
  }
  func.func @transform_0(%arg0: i32, %arg1: i32, %arg2: i32) -> (i32, i32) {
    %c0_i32 = arith.constant 0 : i32
    return %arg0, %arg2 : i32, i32
  }
  func.func @transform_1(%arg0: i32, %arg1: i32, %arg2: i32) -> (i32, i32) {
    %c0_i32 = arith.constant 0 : i32
    return %arg2, %arg1 : i32, i32
  }
  func.func @transform_2(%arg0: i32, %arg1: i32, %arg2: i32) -> (i32, i32) {
    %c0_i32 = arith.constant 0 : i32
    %c0_i32_0 = arith.constant 0 : i32
    return %c0_i32, %arg1 : i32, i32
  }
  func.func @transform_3(%arg0: i32, %arg1: i32, %arg2: i32) -> (i32, i32) {
    %c0_i32 = arith.constant 0 : i32
    return %arg0, %arg1 : i32, i32
  }
}

module attributes {stable_mosaic.version = 11 : i64} {
  func.func @_attn_head_kernel(%arg0: i32, %arg1: i32, %arg2: memref<1x1x8x4xbf16, #tpu.memory_space<vmem>>, %arg3: memref<1x1x8x4xbf16, #tpu.memory_space<vmem>>, %arg4: memref<1x1x8x4xbf16, #tpu.memory_space<vmem>>, %arg5: memref<1x1x8x4xbf16, #tpu.memory_space<vmem>>) attributes {dimension_semantics = [#tpu.dimension_semantics<parallel>, #tpu.dimension_semantics<parallel>], iteration_bounds = array<i64: 2, 8>, scalar_prefetch = 0 : i64, scratch_operands = 0 : i64, tpu.core_type = #tpu.core_type<tc>, window_params = [{transform_indices = @transform_0, window_bounds = array<i64: 1, 1, 8, 4>}, {transform_indices = @transform_1, window_bounds = array<i64: 1, 1, 8, 4>}, {transform_indices = @transform_2, window_bounds = array<i64: 1, 1, 8, 4>}, {transform_indices = @transform_3, window_bounds = array<i64: 1, 1, 8, 4>}]} {
    %c0 = arith.constant 0 : index
    %c0_0 = arith.constant 0 : index
    %c0_1 = arith.constant 0 : index
    %c0_2 = arith.constant 0 : index
    %0 = vector.load %arg2[%c0, %c0_0, %c0_1, %c0_2] : memref<1x1x8x4xbf16, #tpu.memory_space<vmem>>, vector<1x1x8x4xbf16>
    %1 = vector.shape_cast %0 : vector<1x1x8x4xbf16> to vector<8x4xbf16>
    %c0_3 = arith.constant 0 : index
    %c0_4 = arith.constant 0 : index
    %c0_5 = arith.constant 0 : index
    %c0_6 = arith.constant 0 : index
    %2 = vector.load %arg3[%c0_3, %c0_4, %c0_5, %c0_6] : memref<1x1x8x4xbf16, #tpu.memory_space<vmem>>, vector<1x1x8x4xbf16>
    %3 = vector.shape_cast %2 : vector<1x1x8x4xbf16> to vector<8x4xbf16>
    %c0_7 = arith.constant 0 : index
    %c0_8 = arith.constant 0 : index
    %c0_9 = arith.constant 0 : index
    %c0_10 = arith.constant 0 : index
    %4 = vector.load %arg4[%c0_7, %c0_8, %c0_9, %c0_10] : memref<1x1x8x4xbf16, #tpu.memory_space<vmem>>, vector<1x1x8x4xbf16>
    %5 = vector.shape_cast %4 : vector<1x1x8x4xbf16> to vector<8x4xbf16>
    %cst = arith.constant dense<0.000000e+00> : vector<8x8xf32>
    %6 = tpu.matmul %1, %3, %cst {dimension_numbers = #tpu.dot_dimension_numbers<[1], [1], [0], [0], [0, 0, 1, 0], [], []>} : vector<8x4xbf16>, vector<8x4xbf16>, vector<8x8xf32> -> vector<8x8xf32>
    %cst_11 = arith.constant 5.000000e-01 : f32
    %7 = vector.broadcast %cst_11 : f32 to vector<8x8xf32>
    %8 = arith.mulf %6, %7 : vector<8x8xf32>
    %9 = tpu.iota {dimensions = array<i32: 0>} : vector<8x8xi32>
    %10 = tpu.iota {dimensions = array<i32: 1>} : vector<8x8xi32>
    %11 = arith.cmpi sge, %9, %10 : vector<8x8xi32>
    %cst_12 = arith.constant -1.000000e+30 : f32
    %12 = vector.broadcast %cst_12 : f32 to vector<8x8xf32>
    %13 = arith.select %11, %8, %12 : vector<8x8xi1>, vector<8x8xf32>
    %cst_13 = arith.constant dense<0xFF800000> : vector<8xf32>
    %14 = vector.multi_reduction <maximumf>, %13, %cst_13 [1] : vector<8x8xf32> to vector<8xf32>
    %15 = vector.shape_cast %14 : vector<8xf32> to vector<8x1xf32>
    %16 = vector.broadcast %15 : vector<8x1xf32> to vector<8x8xf32>
    %17 = arith.subf %13, %16 : vector<8x8xf32>
    %18 = math.exp %17 : vector<8x8xf32>
    %cst_14 = arith.constant dense<0.000000e+00> : vector<8xf32>
    %19 = vector.multi_reduction <add>, %18, %cst_14 [1] : vector<8x8xf32> to vector<8xf32>
    %20 = vector.shape_cast %19 : vector<8xf32> to vector<8x1xf32>
    %21 = arith.truncf %18 : vector<8x8xf32> to vector<8x8xbf16>
    %cst_15 = arith.constant dense<0.000000e+00> : vector<8x4xf32>
    %22 = tpu.matmul %21, %5, %cst_15 {dimension_numbers = #tpu.dot_dimension_numbers<[1], [0], [0], [1], [0, 0, 1, 1], [], []>} : vector<8x8xbf16>, vector<8x4xbf16>, vector<8x4xf32> -> vector<8x4xf32>
    %23 = vector.broadcast %20 : vector<8x1xf32> to vector<8x4xf32>
    %24 = arith.divf %22, %23 : vector<8x4xf32>
    %25 = arith.truncf %24 : vector<8x4xf32> to vector<8x4xbf16>
    %c0_16 = arith.constant 0 : index
    %c0_17 = arith.constant 0 : index
    %c0_18 = arith.constant 0 : index
    %c0_19 = arith.constant 0 : index
    %26 = vector.load %arg5[%c0_16, %c0_17, %c0_18, %c0_19] : memref<1x1x8x4xbf16, #tpu.memory_space<vmem>>, vector<1x1x8x4xbf16>
    %27 = vector.shape_cast %26 : vector<1x1x8x4xbf16> to vector<8x4xbf16>
    %28 = vector.shape_cast %25 : vector<8x4xbf16> to vector<1x1x8x4xbf16>
    tpu.vector_store %arg5[%c0_16, %c0_17, %c0_18, %c0_19], %28 {strides = array<i32>} : memref<1x1x8x4xbf16, #tpu.memory_space<vmem>>, vector<1x1x8x4xbf16>,
    return
  }
  func.func @transform_0(%arg0: i32, %arg1: i32) -> (i32, i32, i32, i32) {
    %c0_i32 = arith.constant 0 : i32
    %c0_i32_0 = arith.constant 0 : i32
    %c0_i32_1 = arith.constant 0 : i32
    return %arg0, %arg1, %c0_i32, %c0_i32_0 : i32, i32, i32, i32
  }
  func.func @transform_1(%arg0: i32, %arg1: i32) -> (i32, i32, i32, i32) {
    %c0_i32 = arith.constant 0 : i32
    %c0_i32_0 = arith.constant 0 : i32
    %c0_i32_1 = arith.constant 0 : i32
    return %arg0, %arg1, %c0_i32, %c0_i32_0 : i32, i32, i32, i32
  }
  func.func @transform_2(%arg0: i32, %arg1: i32) -> (i32, i32, i32, i32) {
    %c0_i32 = arith.constant 0 : i32
    %c0_i32_0 = arith.constant 0 : i32
    %c0_i32_1 = arith.constant 0 : i32
    return %arg0, %arg1, %c0_i32, %c0_i32_0 : i32, i32, i32, i32
  }
  func.func @transform_3(%arg0: i32, %arg1: i32) -> (i32, i32, i32, i32) {
    %c0_i32 = arith.constant 0 : i32
    %c0_i32_0 = arith.constant 0 : i32
    %c0_i32_1 = arith.constant 0 : i32
    return %arg0, %arg1, %c0_i32, %c0_i32_0 : i32, i32, i32, i32
  }
}

module attributes {stable_mosaic.version = 11 : i64} {
  func.func @_matmul_bias_kernel(%arg0: i32, %arg1: i32, %arg2: i32, %arg3: memref<16x32xbf16, #tpu.memory_space<vmem>>, %arg4: memref<32x32xbf16, #tpu.memory_space<vmem>>, %arg5: memref<1x32xf32, #tpu.memory_space<vmem>>, %arg6: memref<16x32xbf16, #tpu.memory_space<vmem>>, %arg7: memref<16x32xf32, #tpu.memory_space<vmem>>) attributes {dimension_semantics = [#tpu.dimension_semantics<parallel>, #tpu.dimension_semantics<parallel>, #tpu.dimension_semantics<arbitrary>], iteration_bounds = array<i64: 1, 1, 1>, scalar_prefetch = 0 : i64, scratch_operands = 1 : i64, tpu.core_type = #tpu.core_type<tc>, window_params = [{transform_indices = @transform_0, window_bounds = array<i64: 16, 32>}, {transform_indices = @transform_1, window_bounds = array<i64: 32, 32>}, {transform_indices = @transform_2, window_bounds = array<i64: 1, 32>}, {transform_indices = @transform_3, window_bounds = array<i64: 16, 32>}]} {
    %c0_i32 = arith.constant 0 : i32
    %0 = arith.cmpi eq, %arg2, %c0_i32 : i32
    %1 = arith.extui %0 : i1 to i32
    %c0_i32_0 = arith.constant 0 : i32
    %2 = arith.cmpi ne, %1, %c0_i32_0 : i32
    scf.if %2 {
      %cst_10 = arith.constant 0.000000e+00 : f32
      %12 = vector.broadcast %cst_10 : f32 to vector<16x32xf32>
      %c0_11 = arith.constant 0 : index
      %c0_12 = arith.constant 0 : index
      %13 = vector.load %arg7[%c0_11, %c0_12] : memref<16x32xf32, #tpu.memory_space<vmem>>, vector<16x32xf32>
      tpu.vector_store %arg7[%c0_11, %c0_12], %12 {strides = array<i32>} : memref<16x32xf32, #tpu.memory_space<vmem>>, vector<16x32xf32>,
    } else {
    }
    %c0 = arith.constant 0 : index
    %c0_1 = arith.constant 0 : index
    %3 = vector.load %arg7[%c0, %c0_1] : memref<16x32xf32, #tpu.memory_space<vmem>>, vector<16x32xf32>
    %c0_2 = arith.constant 0 : index
    %c0_3 = arith.constant 0 : index
    %4 = vector.load %arg3[%c0_2, %c0_3] : memref<16x32xbf16, #tpu.memory_space<vmem>>, vector<16x32xbf16>
    %c0_4 = arith.constant 0 : index
    %c0_5 = arith.constant 0 : index
    %5 = vector.load %arg4[%c0_4, %c0_5] : memref<32x32xbf16, #tpu.memory_space<vmem>>, vector<32x32xbf16>
    %cst = arith.constant dense<0.000000e+00> : vector<16x32xf32>
    %6 = tpu.matmul %4, %5, %cst {dimension_numbers = #tpu.dot_dimension_numbers<[1], [0], [0], [1], [0, 0, 1, 1], [], []>} : vector<16x32xbf16>, vector<32x32xbf16>, vector<16x32xf32> -> vector<16x32xf32>
    %7 = arith.addf %3, %6 : vector<16x32xf32>
    %c0_6 = arith.constant 0 : index
    %c0_7 = arith.constant 0 : index
    %8 = vector.load %arg7[%c0_6, %c0_7] : memref<16x32xf32, #tpu.memory_space<vmem>>, vector<16x32xf32>
    tpu.vector_store %arg7[%c0_6, %c0_7], %7 {strides = array<i32>} : memref<16x32xf32, #tpu.memory_space<vmem>>, vector<16x32xf32>,
    %c0_i32_8 = arith.constant 0 : i32
    %9 = arith.cmpi eq, %arg2, %c0_i32_8 : i32
    %10 = arith.extui %9 : i1 to i32
    %c0_i32_9 = arith.constant 0 : i32
    %11 = arith.cmpi ne, %10, %c0_i32_9 : i32
    scf.if %11 {
      %c0_10 = arith.constant 0 : index
      %c0_11 = arith.constant 0 : index
      %12 = vector.load %arg7[%c0_10, %c0_11] : memref<16x32xf32, #tpu.memory_space<vmem>>, vector<16x32xf32>
      %c0_12 = arith.constant 0 : index
      %c0_13 = arith.constant 0 : index
      %13 = vector.load %arg5[%c0_12, %c0_13] : memref<1x32xf32, #tpu.memory_space<vmem>>, vector<1x32xf32>
      %14 = vector.broadcast %13 : vector<1x32xf32> to vector<16x32xf32>
      %15 = arith.addf %12, %14 : vector<16x32xf32>
      %16 = arith.truncf %15 : vector<16x32xf32> to vector<16x32xbf16>
      %c0_14 = arith.constant 0 : index
      %c0_15 = arith.constant 0 : index
      %17 = vector.load %arg6[%c0_14, %c0_15] : memref<16x32xbf16, #tpu.memory_space<vmem>>, vector<16x32xbf16>
      tpu.vector_store %arg6[%c0_14, %c0_15], %16 {strides = array<i32>} : memref<16x32xbf16, #tpu.memory_space<vmem>>, vector<16x32xbf16>,
    } else {
    }
    return
  }
  func.func @transform_0(%arg0: i32, %arg1: i32, %arg2: i32) -> (i32, i32) {
    %c0_i32 = arith.constant 0 : i32
    return %arg0, %arg2 : i32, i32
  }
  func.func @transform_1(%arg0: i32, %arg1: i32, %arg2: i32) -> (i32, i32) {
    %c0_i32 = arith.constant 0 : i32
    return %arg2, %arg1 : i32, i32
  }
  func.func @transform_2(%arg0: i32, %arg1: i32, %arg2: i32) -> (i32, i32) {
    %c0_i32 = arith.constant 0 : i32
    %c0_i32_0 = arith.constant 0 : i32
    return %c0_i32, %arg1 : i32, i32
  }
  func.func @transform_3(%arg0: i32, %arg1: i32, %arg2: i32) -> (i32, i32) {
    %c0_i32 = arith.constant 0 : i32
    return %arg0, %arg1 : i32, i32
  }
}

module attributes {stable_mosaic.version = 11 : i64} {
  func.func @_matmul_res_ln_kernel(%arg0: i32, %arg1: i32, %arg2: memref<16x32xbf16, #tpu.memory_space<vmem>>, %arg3: memref<32x32xbf16, #tpu.memory_space<vmem>>, %arg4: memref<1x32xf32, #tpu.memory_space<vmem>>, %arg5: memref<16x32xbf16, #tpu.memory_space<vmem>>, %arg6: memref<1x32xf32, #tpu.memory_space<vmem>>, %arg7: memref<1x32xf32, #tpu.memory_space<vmem>>, %arg8: memref<16x32xbf16, #tpu.memory_space<vmem>>, %arg9: memref<16x32xf32, #tpu.memory_space<vmem>>) attributes {dimension_semantics = [#tpu.dimension_semantics<parallel>, #tpu.dimension_semantics<arbitrary>], iteration_bounds = array<i64: 1, 1>, scalar_prefetch = 0 : i64, scratch_operands = 1 : i64, tpu.core_type = #tpu.core_type<tc>, window_params = [{transform_indices = @transform_0, window_bounds = array<i64: 16, 32>}, {transform_indices = @transform_1, window_bounds = array<i64: 32, 32>}, {pipeline_mode = #tpu.pipeline_mode<synchronous>, transform_indices = @transform_2, window_bounds = array<i64: 1, 32>}, {transform_indices = @transform_3, window_bounds = array<i64: 16, 32>}, {pipeline_mode = #tpu.pipeline_mode<synchronous>, transform_indices = @transform_4, window_bounds = array<i64: 1, 32>}, {pipeline_mode = #tpu.pipeline_mode<synchronous>, transform_indices = @transform_5, window_bounds = array<i64: 1, 32>}, {transform_indices = @transform_6, window_bounds = array<i64: 16, 32>}]} {
    %c0_i32 = arith.constant 0 : i32
    %0 = arith.cmpi eq, %arg1, %c0_i32 : i32
    %1 = arith.extui %0 : i1 to i32
    %c0_i32_0 = arith.constant 0 : i32
    %2 = arith.cmpi ne, %1, %c0_i32_0 : i32
    scf.if %2 {
      %cst_10 = arith.constant 0.000000e+00 : f32
      %12 = vector.broadcast %cst_10 : f32 to vector<16x32xf32>
      %c0_11 = arith.constant 0 : index
      %c0_12 = arith.constant 0 : index
      %13 = vector.load %arg9[%c0_11, %c0_12] : memref<16x32xf32, #tpu.memory_space<vmem>>, vector<16x32xf32>
      tpu.vector_store %arg9[%c0_11, %c0_12], %12 {strides = array<i32>} : memref<16x32xf32, #tpu.memory_space<vmem>>, vector<16x32xf32>,
    } else {
    }
    %c0 = arith.constant 0 : index
    %c0_1 = arith.constant 0 : index
    %3 = vector.load %arg9[%c0, %c0_1] : memref<16x32xf32, #tpu.memory_space<vmem>>, vector<16x32xf32>
    %c0_2 = arith.constant 0 : index
    %c0_3 = arith.constant 0 : index
    %4 = vector.load %arg2[%c0_2, %c0_3] : memref<16x32xbf16, #tpu.memory_space<vmem>>, vector<16x32xbf16>
    %c0_4 = arith.constant 0 : index
    %c0_5 = arith.constant 0 : index
    %5 = vector.load %arg3[%c0_4, %c0_5] : memref<32x32xbf16, #tpu.memory_space<vmem>>, vector<32x32xbf16>
    %cst = arith.constant dense<0.000000e+00> : vector<16x32xf32>
    %6 = tpu.matmul %4, %5, %cst {dimension_numbers = #tpu.dot_dimension_numbers<[1], [0], [0], [1], [0, 0, 1, 1], [], []>} : vector<16x32xbf16>, vector<32x32xbf16>, vector<16x32xf32> -> vector<16x32xf32>
    %7 = arith.addf %3, %6 : vector<16x32xf32>
    %c0_6 = arith.constant 0 : index
    %c0_7 = arith.constant 0 : index
    %8 = vector.load %arg9[%c0_6, %c0_7] : memref<16x32xf32, #tpu.memory_space<vmem>>, vector<16x32xf32>
    tpu.vector_store %arg9[%c0_6, %c0_7], %7 {strides = array<i32>} : memref<16x32xf32, #tpu.memory_space<vmem>>, vector<16x32xf32>,
    %c0_i32_8 = arith.constant 0 : i32
    %9 = arith.cmpi eq, %arg1, %c0_i32_8 : i32
    %10 = arith.extui %9 : i1 to i32
    %c0_i32_9 = arith.constant 0 : i32
    %11 = arith.cmpi ne, %10, %c0_i32_9 : i32
    scf.if %11 {
      %c0_10 = arith.constant 0 : index
      %c0_11 = arith.constant 0 : index
      %12 = vector.load %arg9[%c0_10, %c0_11] : memref<16x32xf32, #tpu.memory_space<vmem>>, vector<16x32xf32>
      %c0_12 = arith.constant 0 : index
      %c0_13 = arith.constant 0 : index
      %13 = vector.load %arg4[%c0_12, %c0_13] : memref<1x32xf32, #tpu.memory_space<vmem>>, vector<1x32xf32>
      %14 = vector.broadcast %13 : vector<1x32xf32> to vector<16x32xf32>
      %15 = arith.addf %12, %14 : vector<16x32xf32>
      %c0_14 = arith.constant 0 : index
      %c0_15 = arith.constant 0 : index
      %16 = vector.load %arg5[%c0_14, %c0_15] : memref<16x32xbf16, #tpu.memory_space<vmem>>, vector<16x32xbf16>
      %17 = arith.extf %16 : vector<16x32xbf16> to vector<16x32xf32>
      %18 = arith.addf %15, %17 : vector<16x32xf32>
      %cst_16 = arith.constant dense<0.000000e+00> : vector<16xf32>
      %19 = vector.multi_reduction <add>, %18, %cst_16 [1] : vector<16x32xf32> to vector<16xf32>
      %20 = vector.shape_cast %19 : vector<16xf32> to vector<16x1xf32>
      %cst_17 = arith.constant 3.200000e+01 : f32
      %21 = vector.broadcast %cst_17 : f32 to vector<16x1xf32>
      %22 = arith.divf %20, %21 : vector<16x1xf32>
      %23 = arith.mulf %18, %18 : vector<16x32xf32>
      %cst_18 = arith.constant dense<0.000000e+00> : vector<16xf32>
      %24 = vector.multi_reduction <add>, %23, %cst_18 [1] : vector<16x32xf32> to vector<16xf32>
      %25 = vector.shape_cast %24 : vector<16xf32> to vector<16x1xf32>
      %cst_19 = arith.constant 3.200000e+01 : f32
      %26 = vector.broadcast %cst_19 : f32 to vector<16x1xf32>
      %27 = arith.divf %25, %26 : vector<16x1xf32>
      %28 = arith.mulf %22, %22 : vector<16x1xf32>
      %29 = arith.subf %27, %28 : vector<16x1xf32>
      %cst_20 = arith.constant 9.99999974E-6 : f32
      %30 = vector.broadcast %cst_20 : f32 to vector<16x1xf32>
      %31 = arith.addf %29, %30 : vector<16x1xf32>
      %32 = math.rsqrt %31 : vector<16x1xf32>
      %33 = vector.broadcast %22 : vector<16x1xf32> to vector<16x32xf32>
      %34 = arith.subf %18, %33 : vector<16x32xf32>
      %35 = vector.broadcast %32 : vector<16x1xf32> to vector<16x32xf32>
      %36 = arith.mulf %34, %35 : vector<16x32xf32>
      %c0_21 = arith.constant 0 : index
      %c0_22 = arith.constant 0 : index
      %37 = vector.load %arg6[%c0_21, %c0_22] : memref<1x32xf32, #tpu.memory_space<vmem>>, vector<1x32xf32>
      %38 = vector.broadcast %37 : vector<1x32xf32> to vector<16x32xf32>
      %39 = arith.mulf %36, %38 : vector<16x32xf32>
      %c0_23 = arith.constant 0 : index
      %c0_24 = arith.constant 0 : index
      %40 = vector.load %arg7[%c0_23, %c0_24] : memref<1x32xf32, #tpu.memory_space<vmem>>, vector<1x32xf32>
      %41 = vector.broadcast %40 : vector<1x32xf32> to vector<16x32xf32>
      %42 = arith.addf %39, %41 : vector<16x32xf32>
      %43 = arith.truncf %42 : vector<16x32xf32> to vector<16x32xbf16>
      %c0_25 = arith.constant 0 : index
      %c0_26 = arith.constant 0 : index
      %44 = vector.load %arg8[%c0_25, %c0_26] : memref<16x32xbf16, #tpu.memory_space<vmem>>, vector<16x32xbf16>
      tpu.vector_store %arg8[%c0_25, %c0_26], %43 {strides = array<i32>} : memref<16x32xbf16, #tpu.memory_space<vmem>>, vector<16x32xbf16>,
    } else {
    }
    return
  }
  func.func @transform_0(%arg0: i32, %arg1: i32) -> (i32, i32) {
    %c0_i32 = arith.constant 0 : i32
    return %arg0, %arg1 : i32, i32
  }
  func.func @transform_1(%arg0: i32, %arg1: i32) -> (i32, i32) {
    %c0_i32 = arith.constant 0 : i32
    %c0_i32_0 = arith.constant 0 : i32
    return %arg1, %c0_i32 : i32, i32
  }
  func.func @transform_2(%arg0: i32, %arg1: i32) -> (i32, i32) {
    %c0_i32 = arith.constant 0 : i32
    %c0_i32_0 = arith.constant 0 : i32
    %c0_i32_1 = arith.constant 0 : i32
    return %c0_i32, %c0_i32_0 : i32, i32
  }
  func.func @transform_3(%arg0: i32, %arg1: i32) -> (i32, i32) {
    %c0_i32 = arith.constant 0 : i32
    %c0_i32_0 = arith.constant 0 : i32
    return %arg0, %c0_i32 : i32, i32
  }
  func.func @transform_4(%arg0: i32, %arg1: i32) -> (i32, i32) {
    %c0_i32 = arith.constant 0 : i32
    %c0_i32_0 = arith.constant 0 : i32
    %c0_i32_1 = arith.constant 0 : i32
    return %c0_i32, %c0_i32_0 : i32, i32
  }
  func.func @transform_5(%arg0: i32, %arg1: i32) -> (i32, i32) {
    %c0_i32 = arith.constant 0 : i32
    %c0_i32_0 = arith.constant 0 : i32
    %c0_i32_1 = arith.constant 0 : i32
    return %c0_i32, %c0_i32_0 : i32, i32
  }
  func.func @transform_6(%arg0: i32, %arg1: i32) -> (i32, i32) {
    %c0_i32 = arith.constant 0 : i32
    %c0_i32_0 = arith.constant 0 : i32
    return %arg0, %c0_i32 : i32, i32
  }
}

module attributes {stable_mosaic.version = 11 : i64} {
  func.func @_attn_head_kernel(%arg0: i32, %arg1: i32, %arg2: memref<1x1x8x4xbf16, #tpu.memory_space<vmem>>, %arg3: memref<1x1x8x4xbf16, #tpu.memory_space<vmem>>, %arg4: memref<1x1x8x4xbf16, #tpu.memory_space<vmem>>, %arg5: memref<1x1x8x4xbf16, #tpu.memory_space<vmem>>) attributes {dimension_semantics = [#tpu.dimension_semantics<parallel>, #tpu.dimension_semantics<parallel>], iteration_bounds = array<i64: 2, 8>, scalar_prefetch = 0 : i64, scratch_operands = 0 : i64, tpu.core_type = #tpu.core_type<tc>, window_params = [{transform_indices = @transform_0, window_bounds = array<i64: 1, 1, 8, 4>}, {transform_indices = @transform_1, window_bounds = array<i64: 1, 1, 8, 4>}, {transform_indices = @transform_2, window_bounds = array<i64: 1, 1, 8, 4>}, {transform_indices = @transform_3, window_bounds = array<i64: 1, 1, 8, 4>}]} {
    %c0 = arith.constant 0 : index
    %c0_0 = arith.constant 0 : index
    %c0_1 = arith.constant 0 : index
    %c0_2 = arith.constant 0 : index
    %0 = vector.load %arg2[%c0, %c0_0, %c0_1, %c0_2] : memref<1x1x8x4xbf16, #tpu.memory_space<vmem>>, vector<1x1x8x4xbf16>
    %1 = vector.shape_cast %0 : vector<1x1x8x4xbf16> to vector<8x4xbf16>
    %c0_3 = arith.constant 0 : index
    %c0_4 = arith.constant 0 : index
    %c0_5 = arith.constant 0 : index
    %c0_6 = arith.constant 0 : index
    %2 = vector.load %arg3[%c0_3, %c0_4, %c0_5, %c0_6] : memref<1x1x8x4xbf16, #tpu.memory_space<vmem>>, vector<1x1x8x4xbf16>
    %3 = vector.shape_cast %2 : vector<1x1x8x4xbf16> to vector<8x4xbf16>
    %c0_7 = arith.constant 0 : index
    %c0_8 = arith.constant 0 : index
    %c0_9 = arith.constant 0 : index
    %c0_10 = arith.constant 0 : index
    %4 = vector.load %arg4[%c0_7, %c0_8, %c0_9, %c0_10] : memref<1x1x8x4xbf16, #tpu.memory_space<vmem>>, vector<1x1x8x4xbf16>
    %5 = vector.shape_cast %4 : vector<1x1x8x4xbf16> to vector<8x4xbf16>
    %cst = arith.constant dense<0.000000e+00> : vector<8x8xf32>
    %6 = tpu.matmul %1, %3, %cst {dimension_numbers = #tpu.dot_dimension_numbers<[1], [1], [0], [0], [0, 0, 1, 0], [], []>} : vector<8x4xbf16>, vector<8x4xbf16>, vector<8x8xf32> -> vector<8x8xf32>
    %cst_11 = arith.constant 5.000000e-01 : f32
    %7 = vector.broadcast %cst_11 : f32 to vector<8x8xf32>
    %8 = arith.mulf %6, %7 : vector<8x8xf32>
    %cst_12 = arith.constant dense<0xFF800000> : vector<8xf32>
    %9 = vector.multi_reduction <maximumf>, %8, %cst_12 [1] : vector<8x8xf32> to vector<8xf32>
    %10 = vector.shape_cast %9 : vector<8xf32> to vector<8x1xf32>
    %11 = vector.broadcast %10 : vector<8x1xf32> to vector<8x8xf32>
    %12 = arith.subf %8, %11 : vector<8x8xf32>
    %13 = math.exp %12 : vector<8x8xf32>
    %cst_13 = arith.constant dense<0.000000e+00> : vector<8xf32>
    %14 = vector.multi_reduction <add>, %13, %cst_13 [1] : vector<8x8xf32> to vector<8xf32>
    %15 = vector.shape_cast %14 : vector<8xf32> to vector<8x1xf32>
    %16 = arith.truncf %13 : vector<8x8xf32> to vector<8x8xbf16>
    %cst_14 = arith.constant dense<0.000000e+00> : vector<8x4xf32>
    %17 = tpu.matmul %16, %5, %cst_14 {dimension_numbers = #tpu.dot_dimension_numbers<[1], [0], [0], [1], [0, 0, 1, 1], [], []>} : vector<8x8xbf16>, vector<8x4xbf16>, vector<8x4xf32> -> vector<8x4xf32>
    %18 = vector.broadcast %15 : vector<8x1xf32> to vector<8x4xf32>
    %19 = arith.divf %17, %18 : vector<8x4xf32>
    %20 = arith.truncf %19 : vector<8x4xf32> to vector<8x4xbf16>
    %c0_15 = arith.constant 0 : index
    %c0_16 = arith.constant 0 : index
    %c0_17 = arith.constant 0 : index
    %c0_18 = arith.constant 0 : index
    %21 = vector.load %arg5[%c0_15, %c0_16, %c0_17, %c0_18] : memref<1x1x8x4xbf16, #tpu.memory_space<vmem>>, vector<1x1x8x4xbf16>
    %22 = vector.shape_cast %21 : vector<1x1x8x4xbf16> to vector<8x4xbf16>
    %23 = vector.shape_cast %20 : vector<8x4xbf16> to vector<1x1x8x4xbf16>
    tpu.vector_store %arg5[%c0_15, %c0_16, %c0_17, %c0_18], %23 {strides = array<i32>} : memref<1x1x8x4xbf16, #tpu.memory_space<vmem>>, vector<1x1x8x4xbf16>,
    return
  }
  func.func @transform_0(%arg0: i32, %arg1: i32) -> (i32, i32, i32, i32) {
    %c0_i32 = arith.constant 0 : i32
    %c0_i32_0 = arith.constant 0 : i32
    %c0_i32_1 = arith.constant 0 : i32
    return %arg0, %arg1, %c0_i32, %c0_i32_0 : i32, i32, i32, i32
  }
  func.func @transform_1(%arg0: i32, %arg1: i32) -> (i32, i32, i32, i32) {
    %c0_i32 = arith.constant 0 : i32
    %c0_i32_0 = arith.constant 0 : i32
    %c0_i32_1 = arith.constant 0 : i32
    return %arg0, %arg1, %c0_i32, %c0_i32_0 : i32, i32, i32, i32
  }
  func.func @transform_2(%arg0: i32, %arg1: i32) -> (i32, i32, i32, i32) {
    %c0_i32 = arith.constant 0 : i32
    %c0_i32_0 = arith.constant 0 : i32
    %c0_i32_1 = arith.constant 0 : i32
    return %arg0, %arg1, %c0_i32, %c0_i32_0 : i32, i32, i32, i32
  }
  func.func @transform_3(%arg0: i32, %arg1: i32) -> (i32, i32, i32, i32) {
    %c0_i32 = arith.constant 0 : i32
    %c0_i32_0 = arith.constant 0 : i32
    %c0_i32_1 = arith.constant 0 : i32
    return %arg0, %arg1, %c0_i32, %c0_i32_0 : i32, i32, i32, i32
  }
}

module attributes {stable_mosaic.version = 11 : i64} {
  func.func @_ffn_res_ln_kernel(%arg0: i32, %arg1: i32, %arg2: memref<16x32xbf16, #tpu.memory_space<vmem>>, %arg3: memref<32x64xbf16, #tpu.memory_space<vmem>>, %arg4: memref<1x64xf32, #tpu.memory_space<vmem>>, %arg5: memref<64x32xbf16, #tpu.memory_space<vmem>>, %arg6: memref<1x32xf32, #tpu.memory_space<vmem>>, %arg7: memref<16x32xbf16, #tpu.memory_space<vmem>>, %arg8: memref<1x32xf32, #tpu.memory_space<vmem>>, %arg9: memref<1x32xf32, #tpu.memory_space<vmem>>, %arg10: memref<16x32xf32, #tpu.memory_space<vmem>>, %arg11: memref<16x32xf32, #tpu.memory_space<vmem>>) attributes {dimension_semantics = [#tpu.dimension_semantics<parallel>, #tpu.dimension_semantics<arbitrary>], iteration_bounds = array<i64: 1, 1>, scalar_prefetch = 0 : i64, scratch_operands = 1 : i64, tpu.core_type = #tpu.core_type<tc>, window_params = [{transform_indices = @transform_0, window_bounds = array<i64: 16, 32>}, {transform_indices = @transform_1, window_bounds = array<i64: 32, 64>}, {transform_indices = @transform_2, window_bounds = array<i64: 1, 64>}, {transform_indices = @transform_3, window_bounds = array<i64: 64, 32>}, {pipeline_mode = #tpu.pipeline_mode<synchronous>, transform_indices = @transform_4, window_bounds = array<i64: 1, 32>}, {transform_indices = @transform_5, window_bounds = array<i64: 16, 32>}, {pipeline_mode = #tpu.pipeline_mode<synchronous>, transform_indices = @transform_6, window_bounds = array<i64: 1, 32>}, {pipeline_mode = #tpu.pipeline_mode<synchronous>, transform_indices = @transform_7, window_bounds = array<i64: 1, 32>}, {transform_indices = @transform_8, window_bounds = array<i64: 16, 32>}]} {
    %c0_i32 = arith.constant 0 : i32
    %0 = arith.cmpi eq, %arg1, %c0_i32 : i32
    %1 = arith.extui %0 : i1 to i32
    %c0_i32_0 = arith.constant 0 : i32
    %2 = arith.cmpi ne, %1, %c0_i32_0 : i32
    scf.if %2 {
      %cst_16 = arith.constant 0.000000e+00 : f32
      %20 = vector.broadcast %cst_16 : f32 to vector<16x32xf32>
      %c0_17 = arith.constant 0 : index
      %c0_18 = arith.constant 0 : index
      %21 = vector.load %arg11[%c0_17, %c0_18] : memref<16x32xf32, #tpu.memory_space<vmem>>, vector<16x32xf32>
      tpu.vector_store %arg11[%c0_17, %c0_18], %20 {strides = array<i32>} : memref<16x32xf32, #tpu.memory_space<vmem>>, vector<16x32xf32>,
    } else {
    }
    %c0 = arith.constant 0 : index
    %c0_1 = arith.constant 0 : index
    %3 = vector.load %arg2[%c0, %c0_1] : memref<16x32xbf16, #tpu.memory_space<vmem>>, vector<16x32xbf16>
    %c0_2 = arith.constant 0 : index
    %c0_3 = arith.constant 0 : index
    %4 = vector.load %arg3[%c0_2, %c0_3] : memref<32x64xbf16, #tpu.memory_space<vmem>>, vector<32x64xbf16>
    %cst = arith.constant dense<0.000000e+00> : vector<16x64xf32>
    %5 = tpu.matmul %3, %4, %cst {dimension_numbers = #tpu.dot_dimension_numbers<[1], [0], [0], [1], [0, 0, 1, 1], [], []>} : vector<16x32xbf16>, vector<32x64xbf16>, vector<16x64xf32> -> vector<16x64xf32>
    %c0_4 = arith.constant 0 : index
    %c0_5 = arith.constant 0 : index
    %6 = vector.load %arg4[%c0_4, %c0_5] : memref<1x64xf32, #tpu.memory_space<vmem>>, vector<1x64xf32>
    %7 = vector.broadcast %6 : vector<1x64xf32> to vector<16x64xf32>
    %8 = arith.addf %5, %7 : vector<16x64xf32>
    %cst_6 = arith.constant 0.000000e+00 : f32
    %9 = vector.broadcast %cst_6 : f32 to vector<16x64xf32>
    %10 = arith.maximumf %8, %9 : vector<16x64xf32>
    %c0_7 = arith.constant 0 : index
    %c0_8 = arith.constant 0 : index
    %11 = vector.load %arg11[%c0_7, %c0_8] : memref<16x32xf32, #tpu.memory_space<vmem>>, vector<16x32xf32>
    %12 = arith.truncf %10 : vector<16x64xf32> to vector<16x64xbf16>
    %c0_9 = arith.constant 0 : index
    %c0_10 = arith.constant 0 : index
    %13 = vector.load %arg5[%c0_9, %c0_10] : memref<64x32xbf16, #tpu.memory_space<vmem>>, vector<64x32xbf16>
    %cst_11 = arith.constant dense<0.000000e+00> : vector<16x32xf32>
    %14 = tpu.matmul %12, %13, %cst_11 {dimension_numbers = #tpu.dot_dimension_numbers<[1], [0], [0], [1], [0, 0, 1, 1], [], []>} : vector<16x64xbf16>, vector<64x32xbf16>, vector<16x32xf32> -> vector<16x32xf32>
    %15 = arith.addf %11, %14 : vector<16x32xf32>
    %c0_12 = arith.constant 0 : index
    %c0_13 = arith.constant 0 : index
    %16 = vector.load %arg11[%c0_12, %c0_13] : memref<16x32xf32, #tpu.memory_space<vmem>>, vector<16x32xf32>
    tpu.vector_store %arg11[%c0_12, %c0_13], %15 {strides = array<i32>} : memref<16x32xf32, #tpu.memory_space<vmem>>, vector<16x32xf32>,
    %c0_i32_14 = arith.constant 0 : i32
    %17 = arith.cmpi eq, %arg1, %c0_i32_14 : i32
    %18 = arith.extui %17 : i1 to i32
    %c0_i32_15 = arith.constant 0 : i32
    %19 = arith.cmpi ne, %18, %c0_i32_15 : i32
    scf.if %19 {
      %c0_16 = arith.constant 0 : index
      %c0_17 = arith.constant 0 : index
      %20 = vector.load %arg11[%c0_16, %c0_17] : memref<16x32xf32, #tpu.memory_space<vmem>>, vector<16x32xf32>
      %c0_18 = arith.constant 0 : index
      %c0_19 = arith.constant 0 : index
      %21 = vector.load %arg6[%c0_18, %c0_19] : memref<1x32xf32, #tpu.memory_space<vmem>>, vector<1x32xf32>
      %22 = vector.broadcast %21 : vector<1x32xf32> to vector<16x32xf32>
      %23 = arith.addf %20, %22 : vector<16x32xf32>
      %c0_20 = arith.constant 0 : index
      %c0_21 = arith.constant 0 : index
      %24 = vector.load %arg7[%c0_20, %c0_21] : memref<16x32xbf16, #tpu.memory_space<vmem>>, vector<16x32xbf16>
      %25 = arith.extf %24 : vector<16x32xbf16> to vector<16x32xf32>
      %26 = arith.addf %23, %25 : vector<16x32xf32>
      %cst_22 = arith.constant dense<0.000000e+00> : vector<16xf32>
      %27 = vector.multi_reduction <add>, %26, %cst_22 [1] : vector<16x32xf32> to vector<16xf32>
      %28 = vector.shape_cast %27 : vector<16xf32> to vector<16x1xf32>
      %cst_23 = arith.constant 3.200000e+01 : f32
      %29 = vector.broadcast %cst_23 : f32 to vector<16x1xf32>
      %30 = arith.divf %28, %29 : vector<16x1xf32>
      %31 = arith.mulf %26, %26 : vector<16x32xf32>
      %cst_24 = arith.constant dense<0.000000e+00> : vector<16xf32>
      %32 = vector.multi_reduction <add>, %31, %cst_24 [1] : vector<16x32xf32> to vector<16xf32>
      %33 = vector.shape_cast %32 : vector<16xf32> to vector<16x1xf32>
      %cst_25 = arith.constant 3.200000e+01 : f32
      %34 = vector.broadcast %cst_25 : f32 to vector<16x1xf32>
      %35 = arith.divf %33, %34 : vector<16x1xf32>
      %36 = arith.mulf %30, %30 : vector<16x1xf32>
      %37 = arith.subf %35, %36 : vector<16x1xf32>
      %cst_26 = arith.constant 9.99999974E-6 : f32
      %38 = vector.broadcast %cst_26 : f32 to vector<16x1xf32>
      %39 = arith.addf %37, %38 : vector<16x1xf32>
      %40 = math.rsqrt %39 : vector<16x1xf32>
      %41 = vector.broadcast %30 : vector<16x1xf32> to vector<16x32xf32>
      %42 = arith.subf %26, %41 : vector<16x32xf32>
      %43 = vector.broadcast %40 : vector<16x1xf32> to vector<16x32xf32>
      %44 = arith.mulf %42, %43 : vector<16x32xf32>
      %c0_27 = arith.constant 0 : index
      %c0_28 = arith.constant 0 : index
      %45 = vector.load %arg8[%c0_27, %c0_28] : memref<1x32xf32, #tpu.memory_space<vmem>>, vector<1x32xf32>
      %46 = vector.broadcast %45 : vector<1x32xf32> to vector<16x32xf32>
      %47 = arith.mulf %44, %46 : vector<16x32xf32>
      %c0_29 = arith.constant 0 : index
      %c0_30 = arith.constant 0 : index
      %48 = vector.load %arg9[%c0_29, %c0_30] : memref<1x32xf32, #tpu.memory_space<vmem>>, vector<1x32xf32>
      %49 = vector.broadcast %48 : vector<1x32xf32> to vector<16x32xf32>
      %50 = arith.addf %47, %49 : vector<16x32xf32>
      %c0_31 = arith.constant 0 : index
      %c0_32 = arith.constant 0 : index
      %51 = vector.load %arg10[%c0_31, %c0_32] : memref<16x32xf32, #tpu.memory_space<vmem>>, vector<16x32xf32>
      tpu.vector_store %arg10[%c0_31, %c0_32], %50 {strides = array<i32>} : memref<16x32xf32, #tpu.memory_space<vmem>>, vector<16x32xf32>,
    } else {
    }
    return
  }
  func.func @transform_0(%arg0: i32, %arg1: i32) -> (i32, i32) {
    %c0_i32 = arith.constant 0 : i32
    %c0_i32_0 = arith.constant 0 : i32
    return %arg0, %c0_i32 : i32, i32
  }
  func.func @transform_1(%arg0: i32, %arg1: i32) -> (i32, i32) {
    %c0_i32 = arith.constant 0 : i32
    %c0_i32_0 = arith.constant 0 : i32
    return %c0_i32, %arg1 : i32, i32
  }
  func.func @transform_2(%arg0: i32, %arg1: i32) -> (i32, i32) {
    %c0_i32 = arith.constant 0 : i32
    %c0_i32_0 = arith.constant 0 : i32
    return %c0_i32, %arg1 : i32, i32
  }
  func.func @transform_3(%arg0: i32, %arg1: i32) -> (i32, i32) {
    %c0_i32 = arith.constant 0 : i32
    %c0_i32_0 = arith.constant 0 : i32
    return %arg1, %c0_i32 : i32, i32
  }
  func.func @transform_4(%arg0: i32, %arg1: i32) -> (i32, i32) {
    %c0_i32 = arith.constant 0 : i32
    %c0_i32_0 = arith.constant 0 : i32
    %c0_i32_1 = arith.constant 0 : i32
    return %c0_i32, %c0_i32_0 : i32, i32
  }
  func.func @transform_5(%arg0: i32, %arg1: i32) -> (i32, i32) {
    %c0_i32 = arith.constant 0 : i32
    %c0_i32_0 = arith.constant 0 : i32
    return %arg0, %c0_i32 : i32, i32
  }
  func.func @transform_6(%arg0: i32, %arg1: i32) -> (i32, i32) {
    %c0_i32 = arith.constant 0 : i32
    %c0_i32_0 = arith.constant 0 : i32
    %c0_i32_1 = arith.constant 0 : i32
    return %c0_i32, %c0_i32_0 : i32, i32
  }
  func.func @transform_7(%arg0: i32, %arg1: i32) -> (i32, i32) {
    %c0_i32 = arith.constant 0 : i32
    %c0_i32_0 = arith.constant 0 : i32
    %c0_i32_1 = arith.constant 0 : i32
    return %c0_i32, %c0_i32_0 : i32, i32
  }
  func.func @transform_8(%arg0: i32, %arg1: i32) -> (i32, i32) {
    %c0_i32 = arith.constant 0 : i32
    %c0_i32_0 = arith.constant 0 : i32
    return %arg0, %c0_i32 : i32, i32
  }
}

module attributes {stable_mosaic.version = 11 : i64} {
  func.func @_matmul_bias_kernel(%arg0: i32, %arg1: i32, %arg2: i32, %arg3: memref<16x32xbf16, #tpu.memory_space<vmem>>, %arg4: memref<32x64xbf16, #tpu.memory_space<vmem>>, %arg5: memref<1x64xf32, #tpu.memory_space<vmem>>, %arg6: memref<16x64xbf16, #tpu.memory_space<vmem>>, %arg7: memref<16x64xf32, #tpu.memory_space<vmem>>) attributes {dimension_semantics = [#tpu.dimension_semantics<parallel>, #tpu.dimension_semantics<parallel>, #tpu.dimension_semantics<arbitrary>], iteration_bounds = array<i64: 1, 1, 1>, scalar_prefetch = 0 : i64, scratch_operands = 1 : i64, tpu.core_type = #tpu.core_type<tc>, window_params = [{transform_indices = @transform_0, window_bounds = array<i64: 16, 32>}, {transform_indices = @transform_1, window_bounds = array<i64: 32, 64>}, {transform_indices = @transform_2, window_bounds = array<i64: 1, 64>}, {transform_indices = @transform_3, window_bounds = array<i64: 16, 64>}]} {
    %c0_i32 = arith.constant 0 : i32
    %0 = arith.cmpi eq, %arg2, %c0_i32 : i32
    %1 = arith.extui %0 : i1 to i32
    %c0_i32_0 = arith.constant 0 : i32
    %2 = arith.cmpi ne, %1, %c0_i32_0 : i32
    scf.if %2 {
      %cst_10 = arith.constant 0.000000e+00 : f32
      %12 = vector.broadcast %cst_10 : f32 to vector<16x64xf32>
      %c0_11 = arith.constant 0 : index
      %c0_12 = arith.constant 0 : index
      %13 = vector.load %arg7[%c0_11, %c0_12] : memref<16x64xf32, #tpu.memory_space<vmem>>, vector<16x64xf32>
      tpu.vector_store %arg7[%c0_11, %c0_12], %12 {strides = array<i32>} : memref<16x64xf32, #tpu.memory_space<vmem>>, vector<16x64xf32>,
    } else {
    }
    %c0 = arith.constant 0 : index
    %c0_1 = arith.constant 0 : index
    %3 = vector.load %arg7[%c0, %c0_1] : memref<16x64xf32, #tpu.memory_space<vmem>>, vector<16x64xf32>
    %c0_2 = arith.constant 0 : index
    %c0_3 = arith.constant 0 : index
    %4 = vector.load %arg3[%c0_2, %c0_3] : memref<16x32xbf16, #tpu.memory_space<vmem>>, vector<16x32xbf16>
    %c0_4 = arith.constant 0 : index
    %c0_5 = arith.constant 0 : index
    %5 = vector.load %arg4[%c0_4, %c0_5] : memref<32x64xbf16, #tpu.memory_space<vmem>>, vector<32x64xbf16>
    %cst = arith.constant dense<0.000000e+00> : vector<16x64xf32>
    %6 = tpu.matmul %4, %5, %cst {dimension_numbers = #tpu.dot_dimension_numbers<[1], [0], [0], [1], [0, 0, 1, 1], [], []>} : vector<16x32xbf16>, vector<32x64xbf16>, vector<16x64xf32> -> vector<16x64xf32>
    %7 = arith.addf %3, %6 : vector<16x64xf32>
    %c0_6 = arith.constant 0 : index
    %c0_7 = arith.constant 0 : index
    %8 = vector.load %arg7[%c0_6, %c0_7] : memref<16x64xf32, #tpu.memory_space<vmem>>, vector<16x64xf32>
    tpu.vector_store %arg7[%c0_6, %c0_7], %7 {strides = array<i32>} : memref<16x64xf32, #tpu.memory_space<vmem>>, vector<16x64xf32>,
    %c0_i32_8 = arith.constant 0 : i32
    %9 = arith.cmpi eq, %arg2, %c0_i32_8 : i32
    %10 = arith.extui %9 : i1 to i32
    %c0_i32_9 = arith.constant 0 : i32
    %11 = arith.cmpi ne, %10, %c0_i32_9 : i32
    scf.if %11 {
      %c0_10 = arith.constant 0 : index
      %c0_11 = arith.constant 0 : index
      %12 = vector.load %arg7[%c0_10, %c0_11] : memref<16x64xf32, #tpu.memory_space<vmem>>, vector<16x64xf32>
      %c0_12 = arith.constant 0 : index
      %c0_13 = arith.constant 0 : index
      %13 = vector.load %arg5[%c0_12, %c0_13] : memref<1x64xf32, #tpu.memory_space<vmem>>, vector<1x64xf32>
      %14 = vector.broadcast %13 : vector<1x64xf32> to vector<16x64xf32>
      %15 = arith.addf %12, %14 : vector<16x64xf32>
      %16 = arith.truncf %15 : vector<16x64xf32> to vector<16x64xbf16>
      %c0_14 = arith.constant 0 : index
      %c0_15 = arith.constant 0 : index
      %17 = vector.load %arg6[%c0_14, %c0_15] : memref<16x64xbf16, #tpu.memory_space<vmem>>, vector<16x64xbf16>
      tpu.vector_store %arg6[%c0_14, %c0_15], %16 {strides = array<i32>} : memref<16x64xbf16, #tpu.memory_space<vmem>>, vector<16x64xbf16>,
    } else {
    }
    return
  }
  func.func @transform_0(%arg0: i32, %arg1: i32, %arg2: i32) -> (i32, i32) {
    %c0_i32 = arith.constant 0 : i32
    return %arg0, %arg2 : i32, i32
  }
  func.func @transform_1(%arg0: i32, %arg1: i32, %arg2: i32) -> (i32, i32) {
    %c0_i32 = arith.constant 0 : i32
    return %arg2, %arg1 : i32, i32
  }
  func.func @transform_2(%arg0: i32, %arg1: i32, %arg2: i32) -> (i32, i32) {
    %c0_i32 = arith.constant 0 : i32
    %c0_i32_0 = arith.constant 0 : i32
    return %c0_i32, %arg1 : i32, i32
  }
  func.func @transform_3(%arg0: i32, %arg1: i32, %arg2: i32) -> (i32, i32) {
    %c0_i32 = arith.constant 0 : i32
    return %arg0, %arg1 : i32, i32
  }
}

</mosaic_0001>

<llo_original>
// kernel: transformer_decoder_unit.8
$region0: #{transformer_decoder_unit.8}
  #allocation0 [shape = 'u32[]', space=smem, size = 0x4, offset = 0x4, fixed_abs, tag = 'smem constant byte address 0x4 - core index']
  #allocation1 [shape = 'u32[72,128]{1,0:T(1,128)}', space=vmem, size = 0x9000, scoped, tag = 'internal scratch']
  #allocation2 [shape = 'f32[16,96]{1,0:T(8,128)}', space=vmem, size = 0x2000, scoped, tag = 'scratch operand']
  %s0 = inlined_call_operand.vmem [shape: bf16[16,32], index: 0, kind: input, shape index: {}]
  %s1 = inlined_call_operand.vmem [shape: bf16[32,96], index: 1, kind: input, shape index: {}]
  %s2 = inlined_call_operand.vmem [shape: f32[1,96], index: 2, kind: input, shape index: {}]
  %s3 = inlined_call_operand.vmem [shape: bf16[16,96], index: 3, kind: output, shape index: {}]
  %s4 = sld [smem:[#allocation0]]
  $region30: #{transformer_decoder_unit.8} parent=0
    _
  %s6 = ssub.s32 1, %s4
  %s7 = scalar_select 0, %s6, %s4
  // Predicated region
  $region2: #{transformer_decoder_unit.8} parent=0 // pred_check
    _
  $region3: #{transformer_decoder_unit.8} parent=0 // pred_check_branch
    %9 = sbr.rel (0) target = $region5
  $region4: #{transformer_decoder_unit.8} parent=0 // pred_region
    _
  $region5: #{transformer_decoder_unit.8} parent=0 // pred_fallthru
    _
  // Predicated region
  $region6: #{transformer_decoder_unit.8} parent=0 // pred_check
    _
  $region7: #{transformer_decoder_unit.8} parent=0 // pred_check_branch
    %11 = sbr.rel (0) target = $region9
  $region8: #{transformer_decoder_unit.8} parent=0 // pred_region
    _
  $region9: #{transformer_decoder_unit.8} parent=0 // pred_fallthru
    _
  // Predicated region
  $region10: #{transformer_decoder_unit.8} parent=0 // pred_check
    _
  $region11: #{transformer_decoder_unit.8} parent=0 // pred_check_branch
    %13 = sbr.rel (0) target = $region13
  $region12: #{transformer_decoder_unit.8} parent=0 // pred_region
    _
  $region13: #{transformer_decoder_unit.8} parent=0 // pred_fallthru
    _
  %p15 = scmp.eq.s32.totalorder 0, 0
  // Predicated region
  $region14: #{transformer_decoder_unit.8} parent=0 // pred_check
    %p16 = pneg %p15
  $region15: #{transformer_decoder_unit.8} parent=0 // pred_check_branch
    %18 = sbr.rel (%p16) target = $region17
  $region16: #{transformer_decoder_unit.8} parent=0 // pred_region
    %vm19 = vcmask 785408
    %20 = vst.msk [vmem:[#allocation2] sm:$0xff] %vm19, 0.0
    %21 = vst.msk [vmem:[#allocation2 + $0x8] sm:$0xff] %vm19, 0.0
  $region17: #{transformer_decoder_unit.8} parent=0 // pred_fallthru
    _
  %v22 = vld [vmem:[#allocation2] sm:$0xff]
  %v23 = vld [vmem:[#allocation2 + $0x8] sm:$0xff]
  %v24 = vld [vmem:[%s0] sm:$0xf]
  %v25 = vld [vmem:[%s0 + $0x4] sm:$0xf]
  %v26 = vld [vmem:[%s1] sm:$0xf]
  %v27 = vld [vmem:[%s1 + $0x4] sm:$0xf]
  %v28 = vld [vmem:[%s1 + $0x8] sm:$0xf]
  %v29 = vld [vmem:[%s1 + $0xc] sm:$0xf]
  %v32 = vunpack.c.l.b16 %v24
  %v33 = vunpack.c.l.b16 %v25
  %v34 = vpack.c.b16 %v33, %v32
  %v39 = vunpack.c.l.b16 %v26
  %v40 = vunpack.c.l.b16 %v27
  %v41 = vunpack.c.l.b16 %v28
  %v42 = vunpack.c.l.b16 %v29
  %v43 = vpack.c.b16 %v40, %v39
  %v44 = vpack.c.b16 %v42, %v41
  %vm47 = vcmask 261120
  %v49 = vsel %vm47, %v34, 0
  %51 = vmatpush.bf16.msra.mxu0 0
  %52 = vmatpush.bf16.msra.mxu0 0
  %53 = vmatpush.bf16.msra.mxu0 0
  %54 = vmatpush.bf16.msra.mxu0 0
  %55 = vmatpush.bf16.msra.mxu0 0
  %56 = vmatpush.bf16.msra.mxu0 0
  %57 = vmatpush.bf16.msra.mxu0 %v44
  %58 = vmatpush.bf16.msra.mxu0 %v43
  %59 = vmatmul.bf16.gmra.mxu0 %v49
  %v60 = vpop.f32.mrf.mxu0
  %v61 = vadd.f32 0.0, %v60
  %v62 = vpop.f32.mrf.mxu0
  %v63 = vadd.f32 0.0, %v62
  %64 = vdwg.mxu0
  %v65 = vadd.f32 %v22, %v61
  %v66 = vadd.f32 %v23, %v63
  %vm67 = vcmask 785408
  %68 = vst.msk [vmem:[#allocation2] sm:$0xff] %vm67, %v65
  %69 = vst.msk [vmem:[#allocation2 + $0x8] sm:$0xff] %vm67, %v66
  // Predicated region
  $region18: #{transformer_decoder_unit.8} parent=0 // pred_check
    %p70 = pneg %p15
  $region19: #{transformer_decoder_unit.8} parent=0 // pred_check_branch
    %72 = sbr.rel (%p70) target = $region21
  $region20: #{transformer_decoder_unit.8} parent=0 // pred_region
    %v73 = vld [vmem:[#allocation2] sm:$0xff]
    %v74 = vld [vmem:[#allocation2 + $0x8] sm:$0xff]
    %v75 = vld [vmem:[%s2] sm:$0x1]
    %v77 = vperm.slane %v75, 0
    %v79 = vadd.f32 %v73, %v77
    %v80 = vadd.f32 %v74, %v77
    %v81 = vpack.c.bf16 %v79, %v79
    %v82 = vpack.c.bf16 %v80, %v80
    %vm83 = vcmask 781312
    %84 = vst.msk [vmem:[%s3] sm:$0xf] %vm83, %v81
    %85 = vst.msk [vmem:[%s3 + $0x4] sm:$0xf] %vm83, %v82
  $region21: #{transformer_decoder_unit.8} parent=0 // pred_fallthru
    _
  // Predicated region
  $region22: #{transformer_decoder_unit.8} parent=0 // pred_check
    _
  $region23: #{transformer_decoder_unit.8} parent=0 // pred_check_branch
    %87 = sbr.rel (0) target = $region25
  $region24: #{transformer_decoder_unit.8} parent=0 // pred_region
    _
  $region25: #{transformer_decoder_unit.8} parent=0 // pred_fallthru
    _
  // Predicated region
  $region26: #{transformer_decoder_unit.8} parent=0 // pred_check
    _
  $region27: #{transformer_decoder_unit.8} parent=0 // pred_check_branch
    %89 = sbr.rel (0) target = $region29
  $region28: #{transformer_decoder_unit.8} parent=0 // pred_region
    _
  $region29: #{transformer_decoder_unit.8} parent=0 // pred_fallthru
    _

// kernel: transformer_decoder_unit.9
$region0: #{transformer_decoder_unit.9}
  #allocation0 [shape = 'u32[]', space=smem, size = 0x4, offset = 0x4, fixed_abs, tag = 'smem constant byte address 0x4 - core index']
  #allocation1 [shape = 'u32[72,128]{1,0:T(1,128)}', space=vmem, size = 0x9000, scoped, tag = 'internal scratch']
  %s0 = inlined_call_operand.vmem [shape: bf16[2,8,8,4], index: 0, kind: input, shape index: {}]
  %s1 = inlined_call_operand.vmem [shape: bf16[2,8,8,4], index: 1, kind: input, shape index: {}]
  %s2 = inlined_call_operand.vmem [shape: bf16[2,8,8,4], index: 2, kind: input, shape index: {}]
  %s3 = inlined_call_operand.vmem [shape: bf16[2,8,8,4], index: 3, kind: output, shape index: {}]
  %s4 = sld [smem:[#allocation0]]
  $region45: #{transformer_decoder_unit.9} parent=0
    _
  %s6 = ssub.s32 1, %s4
  %s7 = scalar_select 0, %s6, %s4
  loop: start=0, step=1, limit=18
  $region2: #{transformer_decoder_unit.9} parent=0 // loop_pre_header
    _
  $region3: #{transformer_decoder_unit.9} parent=0 // loop_header
    %s9 = sphi 0, %s13
    %p10 = scmp.ge.s32.totalorder %s9, 18
    %s16 = sphi 0, %s28
    %s17 = sphi 0, %s24
    %s18 = sphi 0, %s16
    %s19 = sphi 0, %s17
    %s20 = sphi 0, %s18
    %s21 = sphi 0, %s19
    %s33 = sphi 0, %s35
    %s36 = sphi 0, %s33
    %s37 = sphi 0, %s36
    %s53 = sphi 0, %s37
    %s61 = sphi 0, %s63
    %s64 = sphi 0, %s61
    %s65 = sphi 0, %s64
    %s81 = sphi 0, %s65
    %s89 = sphi 0, %s91
    %s92 = sphi 0, %s89
    %s93 = sphi 0, %s92
    %s109 = sphi 0, %s93
    %s117 = sphi 0, %s119
    %s120 = sphi 0, %s117
    %s121 = sphi 0, %s120
    %s137 = sphi 0, %s121
  $region4: #{transformer_decoder_unit.9} parent=0 // loop_header_branch
    %12 = sbr.rel (%p10) target = $region8
  $region5: #{transformer_decoder_unit.9} parent=0 // loop_body
    %s14 = ssub.s32 %s9, 1
    %s15 = ssub.s32 %s9, 2
    %s22 = sadd.s32 1, %s17
    %p23 = scmp.ge.s32.totalorder %s22, 8
    %s24 = scalar_select %p23, 0, %s22
    %s25 = sadd.s32 1, %s16
    %s26 = scalar_select %p23, %s25, %s16
    %p27 = scmp.ge.s32.totalorder %s26, 2
    %s28 = scalar_select %p27, 0, %s26
    %s29 = ssub.s32 %s16, %s28
    %s30 = ssub.s32 %s17, %s24
    %s31 = sor.u32 %s29, %s30
    %p32 = scmp.eq.s32.totalorder %s31, 0
    %s34 = sadd.s32 %s33, 1
    %s35 = scalar_select %p32, %s33, %s34
    %p38 = pneg %p32
    %p39 = scmp.eq.s32.totalorder %s9, 15
    %p40 = por %p38, %p39
    %p41 = scmp.ne.s32.totalorder %s33, %s36
    %p42 = scmp.eq.s32.totalorder %s9, 0
    %p43 = por %p41, %p42
    %p44 = scmp.ne.s32.totalorder %s33, %s36
    %p45 = scmp.eq.s32.totalorder %s14, 15
    %p46 = por %p44, %p45
    %p47 = scmp.ne.s32.totalorder %s36, %s37
    %p48 = scmp.eq.s32.totalorder %s14, 0
    %p49 = por %p47, %p48
    %p50 = scmp.ne.s32.totalorder %s36, %s37
    %p51 = scmp.eq.s32.totalorder %s15, 15
    %p52 = por %p50, %p51
    %p54 = scmp.ne.s32.totalorder %s37, %s53
    %p55 = scmp.eq.s32.totalorder %s15, 0
    %p56 = por %p54, %p55
    %s57 = ssub.s32 %s16, %s28
    %s58 = ssub.s32 %s17, %s24
    %s59 = sor.u32 %s57, %s58
    %p60 = scmp.eq.s32.totalorder %s59, 0
    %s62 = sadd.s32 %s61, 1
    %s63 = scalar_select %p60, %s61, %s62
    %p66 = pneg %p60
    %p67 = scmp.eq.s32.totalorder %s9, 15
    %p68 = por %p66, %p67
    %p69 = scmp.ne.s32.totalorder %s61, %s64
    %p70 = scmp.eq.s32.totalorder %s9, 0
    %p71 = por %p69, %p70
    %p72 = scmp.ne.s32.totalorder %s61, %s64
    %p73 = scmp.eq.s32.totalorder %s14, 15
    %p74 = por %p72, %p73
    %p75 = scmp.ne.s32.totalorder %s64, %s65
    %p76 = scmp.eq.s32.totalorder %s14, 0
    %p77 = por %p75, %p76
    %p78 = scmp.ne.s32.totalorder %s64, %s65
    %p79 = scmp.eq.s32.totalorder %s15, 15
    %p80 = por %p78, %p79
    %p82 = scmp.ne.s32.totalorder %s65, %s81
    %p83 = scmp.eq.s32.totalorder %s15, 0
    %p84 = por %p82, %p83
    %s85 = ssub.s32 %s16, %s28
    %s86 = ssub.s32 %s17, %s24
    %s87 = sor.u32 %s85, %s86
    %p88 = scmp.eq.s32.totalorder %s87, 0
    %s90 = sadd.s32 %s89, 1
    %s91 = scalar_select %p88, %s89, %s90
    %p94 = pneg %p88
    %p95 = scmp.eq.s32.totalorder %s9, 15
    %p96 = por %p94, %p95
    %p97 = scmp.ne.s32.totalorder %s89, %s92
    %p98 = scmp.eq.s32.totalorder %s9, 0
    %p99 = por %p97, %p98
    %p100 = scmp.ne.s32.totalorder %s89, %s92
    %p101 = scmp.eq.s32.totalorder %s14, 15
    %p102 = por %p100, %p101
    %p103 = scmp.ne.s32.totalorder %s92, %s93
    %p104 = scmp.eq.s32.totalorder %s14, 0
    %p105 = por %p103, %p104
    %p106 = scmp.ne.s32.totalorder %s92, %s93
    %p107 = scmp.eq.s32.totalorder %s15, 15
    %p108 = por %p106, %p107
    %p110 = scmp.ne.s32.totalorder %s93, %s109
    %p111 = scmp.eq.s32.totalorder %s15, 0
    %p112 = por %p110, %p111
    %s113 = ssub.s32 %s16, %s28
    %s114 = ssub.s32 %s17, %s24
    %s115 = sor.u32 %s113, %s114
    %p116 = scmp.eq.s32.totalorder %s115, 0
    %s118 = sadd.s32 %s117, 1
    %s119 = scalar_select %p116, %s117, %s118
    %p122 = pneg %p116
    %p123 = scmp.eq.s32.totalorder %s9, 15
    %p124 = por %p122, %p123
    %p125 = scmp.ne.s32.totalorder %s117, %s120
    %p126 = scmp.eq.s32.totalorder %s9, 0
    %p127 = por %p125, %p126
    %p128 = scmp.ne.s32.totalorder %s117, %s120
    %p129 = scmp.eq.s32.totalorder %s14, 15
    %p130 = por %p128, %p129
    %p131 = scmp.ne.s32.totalorder %s120, %s121
    %p132 = scmp.eq.s32.totalorder %s14, 0
    %p133 = por %p131, %p132
    %p134 = scmp.ne.s32.totalorder %s120, %s121
    %p135 = scmp.eq.s32.totalorder %s15, 15
    %p136 = por %p134, %p135
    %p138 = scmp.ne.s32.totalorder %s121, %s137
    %p139 = scmp.eq.s32.totalorder %s15, 0
    %p140 = por %p138, %p139
    %p141 = scmp.le.s32.totalorder 1, %s9
    %p142 = scmp.lt.s32.totalorder %s9, 17
    %p143 = pnand %p141, %p142
    %p144 = pneg %p143
    // Predicated region
    $region9: #{transformer_decoder_unit.9} parent=5 // pred_check
      _
    $region10: #{transformer_decoder_unit.9} parent=5 // pred_check_branch
      %146 = sbr.rel (%p143) target = $region12
    $region11: #{transformer_decoder_unit.9} parent=5 // pred_region
      %s147 = ssub.s32 %s9, 1
    $region12: #{transformer_decoder_unit.9} parent=5 // pred_fallthru
      _
    %p148 = scmp.lt.s32.totalorder %s9, 16
    // Predicated region
    $region13: #{transformer_decoder_unit.9} parent=5 // pred_check
      %p149 = pneg %p148
    $region14: #{transformer_decoder_unit.9} parent=5 // pred_check_branch
      %151 = sbr.rel (%p149) target = $region16
    $region15: #{transformer_decoder_unit.9} parent=5 // pred_region
      // Predicated region
      $region17: #{transformer_decoder_unit.9} parent=15 // pred_check
        %p152 = pneg %p43
      $region18: #{transformer_decoder_unit.9} parent=15 // pred_check_branch
        %154 = sbr.rel (%p152) target = $region20
      $region19: #{transformer_decoder_unit.9} parent=15 // pred_region
        %p155 = scmp.lt.s32.totalorder %s16, 1
        %s156 = scalar_select %p155, %s16, 1
        %p157 = scmp.lt.s32.totalorder %s17, 7
        %s158 = scalar_select %p157, %s17, 7
        %s159 = smul.addr %s156, 8
        %s160 = sadd.s32 %s158, %s159
        %s161 = smul.addr %s160, 4
        %s162 = scalar_lea.vmem %s0, %s161
      $region20: #{transformer_decoder_unit.9} parent=15 // pred_fallthru
        _
      // Predicated region
      $region21: #{transformer_decoder_unit.9} parent=15 // pred_check
        %p163 = pneg %p71
      $region22: #{transformer_decoder_unit.9} parent=15 // pred_check_branch
        %165 = sbr.rel (%p163) target = $region24
      $region23: #{transformer_decoder_unit.9} parent=15 // pred_region
        %p166 = scmp.lt.s32.totalorder %s16, 1
        %s167 = scalar_select %p166, %s16, 1
        %p168 = scmp.lt.s32.totalorder %s17, 7
        %s169 = scalar_select %p168, %s17, 7
        %s170 = smul.addr %s167, 8
        %s171 = sadd.s32 %s169, %s170
        %s172 = smul.addr %s171, 4
        %s173 = scalar_lea.vmem %s1, %s172
      $region24: #{transformer_decoder_unit.9} parent=15 // pred_fallthru
        _
      // Predicated region
      $region25: #{transformer_decoder_unit.9} parent=15 // pred_check
        %p174 = pneg %p99
      $region26: #{transformer_decoder_unit.9} parent=15 // pred_check_branch
        %176 = sbr.rel (%p174) target = $region28
      $region27: #{transformer_decoder_unit.9} parent=15 // pred_region
        %p177 = scmp.lt.s32.totalorder %s16, 1
        %s178 = scalar_select %p177, %s16, 1
        %p179 = scmp.lt.s32.totalorder %s17, 7
        %s180 = scalar_select %p179, %s17, 7
        %s181 = smul.addr %s178, 8
        %s182 = sadd.s32 %s180, %s181
        %s183 = smul.addr %s182, 4
        %s184 = scalar_lea.vmem %s2, %s183
      $region28: #{transformer_decoder_unit.9} parent=15 // pred_fallthru
        _
    $region16: #{transformer_decoder_unit.9} parent=5 // pred_fallthru
      _
    %p185 = scmp.le.s32.totalorder 1, %s9
    %p186 = scmp.lt.s32.totalorder %s9, 17
    %p187 = pnand %p185, %p186
    %p188 = pneg %p187
    // Predicated region
    $region29: #{transformer_decoder_unit.9} parent=5 // pred_check
      _
    $region30: #{transformer_decoder_unit.9} parent=5 // pred_check_branch
      %190 = sbr.rel (%p187) target = $region32
    $region31: #{transformer_decoder_unit.9} parent=5 // pred_region
      %s191 = ssub.s32 %s9, 1
      %p192 = scmp.lt.s32.totalorder %s18, 1
      %s193 = scalar_select %p192, %s18, 1
      %p194 = scmp.lt.s32.totalorder %s19, 7
      %s195 = scalar_select %p194, %s19, 7
      %s196 = smul.addr %s193, 8
      %s197 = sadd.s32 %s195, %s196
      %s198 = smul.addr %s197, 4
      %s199 = scalar_lea.vmem %s0, %s198
      %p200 = pneg %p49
      %p201 = pneg %p46
      %p202 = scmp.lt.s32.totalorder %s18, 1
      %s203 = scalar_select %p202, %s18, 1
      %p204 = scmp.lt.s32.totalorder %s19, 7
      %s205 = scalar_select %p204, %s19, 7
      %s206 = smul.addr %s203, 8
      %s207 = sadd.s32 %s205, %s206
      %s208 = smul.addr %s207, 4
      %s209 = scalar_lea.vmem %s1, %s208
      %p210 = pneg %p77
      %p211 = pneg %p74
      %p212 = scmp.lt.s32.totalorder %s18, 1
      %s213 = scalar_select %p212, %s18, 1
      %p214 = scmp.lt.s32.totalorder %s19, 7
      %s215 = scalar_select %p214, %s19, 7
      %s216 = smul.addr %s213, 8
      %s217 = sadd.s32 %s215, %s216
      %s218 = smul.addr %s217, 4
      %s219 = scalar_lea.vmem %s2, %s218
      %p220 = pneg %p105
      %p221 = pneg %p102
      %p222 = pneg %p133
      %p223 = pneg %p130
      %p224 = scmp.lt.s32.totalorder %s18, 1
      %s225 = scalar_select %p224, %s18, 1
      %p226 = scmp.lt.s32.totalorder %s19, 7
      %s227 = scalar_select %p226, %s19, 7
      %s228 = smul.addr %s225, 8
      %s229 = sadd.s32 %s227, %s228
      %s230 = smul.addr %s229, 4
      %s231 = scalar_lea.vmem %s3, %s230
      %p232 = scmp.lt.s32.totalorder %s18, 1
      %s233 = scalar_select %p232, %s18, 1
      %p234 = scmp.lt.s32.totalorder %s19, 7
      %s235 = scalar_select %p234, %s19, 7
      %s236 = smul.addr %s233, 8
      %s237 = sadd.s32 %s235, %s236
      %s238 = smul.addr %s237, 4
      %s239 = scalar_lea.vmem %s0, %s238
      %p240 = scmp.lt.s32.totalorder %s18, 1
      %s241 = scalar_select %p240, %s18, 1
      %p242 = scmp.lt.s32.totalorder %s19, 7
      %s243 = scalar_select %p242, %s19, 7
      %s244 = smul.addr %s241, 8
      %s245 = sadd.s32 %s243, %s244
      %s246 = smul.addr %s245, 4
      %s247 = scalar_lea.vmem %s1, %s246
      %p248 = scmp.lt.s32.totalorder %s18, 1
      %s249 = scalar_select %p248, %s18, 1
      %p250 = scmp.lt.s32.totalorder %s19, 7
      %s251 = scalar_select %p250, %s19, 7
      %s252 = smul.addr %s249, 8
      %s253 = sadd.s32 %s251, %s252
      %s254 = smul.addr %s253, 4
      %s255 = scalar_lea.vmem %s2, %s254
      %p256 = scmp.lt.s32.totalorder %s18, 1
      %s257 = scalar_select %p256, %s18, 1
      %p258 = scmp.lt.s32.totalorder %s19, 7
      %s259 = scalar_select %p258, %s19, 7
      %s260 = smul.addr %s257, 8
      %s261 = sadd.s32 %s259, %s260
      %s262 = smul.addr %s261, 4
      %s263 = scalar_lea.vmem %s3, %s262
      %v265 = vld [vmem:[%s239] sm:$0xf]
      %v266 = vld [vmem:[%s247] sm:$0xf]
      %v267 = vld [vmem:[%s255] sm:$0xf]
      %vm268 = vcmask 31744
      %v270 = vsel %vm268, %v265, 0
      %v273 = vsel %vm268, %v266, 0
      %275 = vmatpush.bf16.xpose.msra.mxu0 0
      %276 = vmatpush.bf16.xpose.msra.mxu0 0
      %277 = vmatpush.bf16.xpose.msra.mxu0 0
      %278 = vmatpush.bf16.xpose.msra.mxu0 0
      %279 = vmatpush.bf16.xpose.msra.mxu0 0
      %280 = vmatpush.bf16.xpose.msra.mxu0 0
      %281 = vmatpush.bf16.xpose.msra.mxu0 0
      %282 = vmatpush.bf16.xpose.msra.mxu0 %v273
      %283 = vmatmul.bf16.gmra.mxu0 %v270
      %v284 = vpop.f32.mrf.mxu0
      %v285 = vadd.f32 0.0, %v284
      %v286 = vpop.f32.mrf.mxu0
      %287 = vdwg.mxu0
      %v288 = vmul.f32 %v285, 0.5
      %v289 = vlaneseq
      %v290 = vshrl.u32 %v289, 7
      %v291 = vlaneseq
      %v292 = vand.u32 %v291, 127
      %vm293 = vcmp.ge.s32.totalorder %v290, %v292
      %v294 = vsel %vm293, %v288, -1e+30
      %vm295 = vcmask 64512
      %v296 = vsel %vm295, %v294, -inf
      %297 = vmax.xlane.f32.xlu0 %v296
      %v298 = vpop.xlane.xlu0 %297
      %v299 = vsub.f32 %v294, %v298
      %v300 = vmul.f32 %v299, 1.442695
      %v301 = vpow.pop %v300
      %v302 = vsel %vm295, %v301, 0.0
      %303 = vadd.xlane.f32.xlu0 %v302
      %v304 = vpop.xlane.xlu0 %303
      %v305 = vpack.c.bf16 %v301, %v301
      %v307 = vsel %vm295, %v305, 0
      %vm309 = vcmask 1043456
      %v311 = vsel %vm309, %v267, 0
      %313 = vmatpush.bf16.msra.mxu0 0
      %314 = vmatpush.bf16.msra.mxu0 0
      %315 = vmatpush.bf16.msra.mxu0 0
      %316 = vmatpush.bf16.msra.mxu0 0
      %317 = vmatpush.bf16.msra.mxu0 0
      %318 = vmatpush.bf16.msra.mxu0 0
      %319 = vmatpush.bf16.msra.mxu0 0
      %320 = vmatpush.bf16.msra.mxu0 %v311
      %321 = vmatmul.bf16.gmra.mxu0 %v307
      %v322 = vpop.f32.mrf.mxu0
      %v323 = vadd.f32 0.0, %v322
      %v324 = vpop.f32.mrf.mxu0
      %325 = vdwg.mxu0
      %v326 = vrcp.pop %v304
      %v327 = vmul.f32 %v304, %v326
      %v328 = vsub.f32 1.0, %v327
      %v329 = vmul.f32 %v326, %v328
      %v330 = vadd.f32 %v326, %v329
      %vm331 = vweird.f32 %v304
      %vm332 = vweird.f32 %v326
      %vm333 = vmor %vm331, %vm332
      %v334 = vsel %vm333, %v326, %v330
      %v335 = vand.u32 2147483647, %v304
      %vm336 = vcmp.eq.f32.partialorder %v335, 8.507059e+37
      %v337 = vand.u32 %v304, 2147483648
      %v338 = vor.u32 1.1754944e-38, %v337
      %v339 = vsel %vm336, %v338, %v334
      %v340 = vmul.f32 %v323, %v339
      %v341 = vpack.c.bf16 %v340, %v340
      %vm342 = vcmask 27648
      %343 = vst.msk [vmem:[%s263] sm:$0xf] %vm342, %v341
      %p344 = scmp.lt.s32.totalorder %s18, 1
      %s345 = scalar_select %p344, %s18, 1
      %p346 = scmp.lt.s32.totalorder %s19, 7
      %s347 = scalar_select %p346, %s19, 7
      %s348 = smul.addr %s345, 8
      %s349 = sadd.s32 %s347, %s348
      %s350 = smul.addr %s349, 4
      %s351 = scalar_lea.vmem %s3, %s350
      // Predicated region
      $region33: #{transformer_decoder_unit.9} parent=31 // pred_check
        %p352 = pneg %p130
      $region34: #{transformer_decoder_unit.9} parent=31 // pred_check_branch
        %354 = sbr.rel (%p352) target = $region36
      $region35: #{transformer_decoder_unit.9} parent=31 // pred_region
        _
      $region36: #{transformer_decoder_unit.9} parent=31 // pred_fallthru
        _
    $region32: #{transformer_decoder_unit.9} parent=5 // pred_fallthru
      _
    %p355 = scmp.le.s32.totalorder 2, %s9
    // Predicated region
    $region37: #{transformer_decoder_unit.9} parent=5 // pred_check
      %p356 = pneg %p355
    $region38: #{transformer_decoder_unit.9} parent=5 // pred_check_branch
      %358 = sbr.rel (%p356) target = $region40
    $region39: #{transformer_decoder_unit.9} parent=5 // pred_region
      %s359 = ssub.s32 %s9, 2
      // Predicated region
      $region41: #{transformer_decoder_unit.9} parent=39 // pred_check
        %p360 = pneg %p136
      $region42: #{transformer_decoder_unit.9} parent=39 // pred_check_branch
        %362 = sbr.rel (%p360) target = $region44
      $region43: #{transformer_decoder_unit.9} parent=39 // pred_region
        %p363 = scmp.lt.s32.totalorder %s20, 1
        %s364 = scalar_select %p363, %s20, 1
        %p365 = scmp.lt.s32.totalorder %s21, 7
        %s366 = scalar_select %p365, %s21, 7
        %s367 = smul.addr %s364, 8
        %s368 = sadd.s32 %s366, %s367
        %s369 = smul.addr %s368, 4
        %s370 = scalar_lea.vmem %s3, %s369
      $region44: #{transformer_decoder_unit.9} parent=39 // pred_fallthru
        _
    $region40: #{transformer_decoder_unit.9} parent=5 // pred_fallthru
      _
  $region6: #{transformer_decoder_unit.9} parent=0 // loop_footer
    %s13 = sadd.s32 1, %s9
  $region7: #{transformer_decoder_unit.9} parent=0 // loop_footer_branch
    %8 = sbr.rel target = $region3
  $region8: #{transformer_decoder_unit.9} parent=0 // loop_exit
    _

// kernel: transformer_decoder_unit.11
$region0: #{transformer_decoder_unit.11}
  #allocation0 [shape = 'u32[]', space=smem, size = 0x4, offset = 0x4, fixed_abs, tag = 'smem constant byte address 0x4 - core index']
  #allocation1 [shape = 'u32[72,128]{1,0:T(1,128)}', space=vmem, size = 0x9000, scoped, tag = 'internal scratch']
  #allocation2 [shape = 'f32[16,32]{1,0:T(8,128)}', space=vmem, size = 0x2000, scoped, tag = 'scratch operand']
  %s0 = inlined_call_operand.vmem [shape: bf16[16,32], index: 0, kind: input, shape index: {}]
  %s1 = inlined_call_operand.vmem [shape: bf16[32,32], index: 1, kind: input, shape index: {}]
  %s2 = inlined_call_operand.vmem [shape: f32[1,32], index: 2, kind: input, shape index: {}]
  %s3 = inlined_call_operand.vmem [shape: bf16[16,32], index: 3, kind: output, shape index: {}]
  %s4 = sld [smem:[#allocation0]]
  $region30: #{transformer_decoder_unit.11} parent=0
    _
  %s6 = ssub.s32 1, %s4
  %s7 = scalar_select 0, %s6, %s4
  // Predicated region
  $region2: #{transformer_decoder_unit.11} parent=0 // pred_check
    _
  $region3: #{transformer_decoder_unit.11} parent=0 // pred_check_branch
    %9 = sbr.rel (0) target = $region5
  $region4: #{transformer_decoder_unit.11} parent=0 // pred_region
    _
  $region5: #{transformer_decoder_unit.11} parent=0 // pred_fallthru
    _
  // Predicated region
  $region6: #{transformer_decoder_unit.11} parent=0 // pred_check
    _
  $region7: #{transformer_decoder_unit.11} parent=0 // pred_check_branch
    %11 = sbr.rel (0) target = $region9
  $region8: #{transformer_decoder_unit.11} parent=0 // pred_region
    _
  $region9: #{transformer_decoder_unit.11} parent=0 // pred_fallthru
    _
  // Predicated region
  $region10: #{transformer_decoder_unit.11} parent=0 // pred_check
    _
  $region11: #{transformer_decoder_unit.11} parent=0 // pred_check_branch
    %13 = sbr.rel (0) target = $region13
  $region12: #{transformer_decoder_unit.11} parent=0 // pred_region
    _
  $region13: #{transformer_decoder_unit.11} parent=0 // pred_fallthru
    _
  %p15 = scmp.eq.s32.totalorder 0, 0
  // Predicated region
  $region14: #{transformer_decoder_unit.11} parent=0 // pred_check
    %p16 = pneg %p15
  $region15: #{transformer_decoder_unit.11} parent=0 // pred_check_branch
    %18 = sbr.rel (%p16) target = $region17
  $region16: #{transformer_decoder_unit.11} parent=0 // pred_region
    %vm19 = vcmask 261120
    %20 = vst.msk [vmem:[#allocation2] sm:$0xff] %vm19, 0.0
    %21 = vst.msk [vmem:[#allocation2 + $0x8] sm:$0xff] %vm19, 0.0
  $region17: #{transformer_decoder_unit.11} parent=0 // pred_fallthru
    _
  %v22 = vld [vmem:[#allocation2] sm:$0xff]
  %v23 = vld [vmem:[#allocation2 + $0x8] sm:$0xff]
  %v24 = vld [vmem:[%s0] sm:$0xf]
  %v25 = vld [vmem:[%s0 + $0x4] sm:$0xf]
  %v26 = vld [vmem:[%s1] sm:$0xf]
  %v27 = vld [vmem:[%s1 + $0x4] sm:$0xf]
  %v28 = vld [vmem:[%s1 + $0x8] sm:$0xf]
  %v29 = vld [vmem:[%s1 + $0xc] sm:$0xf]
  %v32 = vunpack.c.l.b16 %v24
  %v33 = vunpack.c.l.b16 %v25
  %v34 = vpack.c.b16 %v33, %v32
  %v39 = vunpack.c.l.b16 %v26
  %v40 = vunpack.c.l.b16 %v27
  %v41 = vunpack.c.l.b16 %v28
  %v42 = vunpack.c.l.b16 %v29
  %v43 = vpack.c.b16 %v40, %v39
  %v44 = vpack.c.b16 %v42, %v41
  %vm47 = vcmask 261120
  %v49 = vsel %vm47, %v34, 0
  %51 = vmatpush.bf16.msra.mxu0 0
  %52 = vmatpush.bf16.msra.mxu0 0
  %53 = vmatpush.bf16.msra.mxu0 0
  %54 = vmatpush.bf16.msra.mxu0 0
  %55 = vmatpush.bf16.msra.mxu0 0
  %56 = vmatpush.bf16.msra.mxu0 0
  %57 = vmatpush.bf16.msra.mxu0 %v44
  %58 = vmatpush.bf16.msra.mxu0 %v43
  %59 = vmatmul.bf16.gmra.mxu0 %v49
  %v60 = vpop.f32.mrf.mxu0
  %v61 = vadd.f32 0.0, %v60
  %v62 = vpop.f32.mrf.mxu0
  %v63 = vadd.f32 0.0, %v62
  %64 = vdwg.mxu0
  %v65 = vadd.f32 %v22, %v61
  %v66 = vadd.f32 %v23, %v63
  %67 = vst.msk [vmem:[#allocation2] sm:$0xff] %vm47, %v65
  %68 = vst.msk [vmem:[#allocation2 + $0x8] sm:$0xff] %vm47, %v66
  // Predicated region
  $region18: #{transformer_decoder_unit.11} parent=0 // pred_check
    %p69 = pneg %p15
  $region19: #{transformer_decoder_unit.11} parent=0 // pred_check_branch
    %71 = sbr.rel (%p69) target = $region21
  $region20: #{transformer_decoder_unit.11} parent=0 // pred_region
    %v72 = vld [vmem:[#allocation2] sm:$0xff]
    %v73 = vld [vmem:[#allocation2 + $0x8] sm:$0xff]
    %v74 = vld [vmem:[%s2] sm:$0x1]
    %v76 = vperm.slane %v74, 0
    %v78 = vadd.f32 %v72, %v76
    %v79 = vadd.f32 %v73, %v76
    %v80 = vpack.c.bf16 %v78, %v78
    %v81 = vpack.c.bf16 %v79, %v79
    %vm82 = vcmask 257024
    %83 = vst.msk [vmem:[%s3] sm:$0xf] %vm82, %v80
    %84 = vst.msk [vmem:[%s3 + $0x4] sm:$0xf] %vm82, %v81
  $region21: #{transformer_decoder_unit.11} parent=0 // pred_fallthru
    _
  // Predicated region
  $region22: #{transformer_decoder_unit.11} parent=0 // pred_check
    _
  $region23: #{transformer_decoder_unit.11} parent=0 // pred_check_branch
    %86 = sbr.rel (0) target = $region25
  $region24: #{transformer_decoder_unit.11} parent=0 // pred_region
    _
  $region25: #{transformer_decoder_unit.11} parent=0 // pred_fallthru
    _
  // Predicated region
  $region26: #{transformer_decoder_unit.11} parent=0 // pred_check
    _
  $region27: #{transformer_decoder_unit.11} parent=0 // pred_check_branch
    %88 = sbr.rel (0) target = $region29
  $region28: #{transformer_decoder_unit.11} parent=0 // pred_region
    _
  $region29: #{transformer_decoder_unit.11} parent=0 // pred_fallthru
    _

// kernel: transformer_decoder_unit.10
$region0: #{transformer_decoder_unit.10}
  #allocation0 [shape = 'u32[]', space=smem, size = 0x4, offset = 0x4, fixed_abs, tag = 'smem constant byte address 0x4 - core index']
  #allocation1 [shape = 'u32[72,128]{1,0:T(1,128)}', space=vmem, size = 0x9000, scoped, tag = 'internal scratch']
  #allocation2 [shape = 'f32[16,32]{1,0:T(8,128)}', space=vmem, size = 0x2000, scoped, tag = 'scratch operand']
  %s0 = inlined_call_operand.vmem [shape: bf16[16,32], index: 0, kind: input, shape index: {}]
  %s1 = inlined_call_operand.vmem [shape: bf16[32,32], index: 1, kind: input, shape index: {}]
  %s2 = inlined_call_operand.vmem [shape: f32[1,32], index: 2, kind: input, shape index: {}]
  %s3 = inlined_call_operand.vmem [shape: bf16[16,32], index: 3, kind: input, shape index: {}]
  %s4 = inlined_call_operand.vmem [shape: f32[1,32], index: 4, kind: input, shape index: {}]
  %s5 = inlined_call_operand.vmem [shape: f32[1,32], index: 5, kind: input, shape index: {}]
  %s6 = inlined_call_operand.vmem [shape: bf16[16,32], index: 6, kind: output, shape index: {}]
  %s7 = sld [smem:[#allocation0]]
  $region42: #{transformer_decoder_unit.10} parent=0
    _
  %s9 = ssub.s32 1, %s7
  %s10 = scalar_select 0, %s9, %s7
  // Predicated region
  $region2: #{transformer_decoder_unit.10} parent=0 // pred_check
    _
  $region3: #{transformer_decoder_unit.10} parent=0 // pred_check_branch
    %12 = sbr.rel (0) target = $region5
  $region4: #{transformer_decoder_unit.10} parent=0 // pred_region
    _
  $region5: #{transformer_decoder_unit.10} parent=0 // pred_fallthru
    _
  // Predicated region
  $region6: #{transformer_decoder_unit.10} parent=0 // pred_check
    _
  $region7: #{transformer_decoder_unit.10} parent=0 // pred_check_branch
    %14 = sbr.rel (0) target = $region9
  $region8: #{transformer_decoder_unit.10} parent=0 // pred_region
    _
  $region9: #{transformer_decoder_unit.10} parent=0 // pred_fallthru
    _
  // Predicated region
  $region10: #{transformer_decoder_unit.10} parent=0 // pred_check
    _
  $region11: #{transformer_decoder_unit.10} parent=0 // pred_check_branch
    %16 = sbr.rel (0) target = $region13
  $region12: #{transformer_decoder_unit.10} parent=0 // pred_region
    _
  $region13: #{transformer_decoder_unit.10} parent=0 // pred_fallthru
    _
  // Predicated region
  $region14: #{transformer_decoder_unit.10} parent=0 // pred_check
    _
  $region15: #{transformer_decoder_unit.10} parent=0 // pred_check_branch
    %18 = sbr.rel (0) target = $region17
  $region16: #{transformer_decoder_unit.10} parent=0 // pred_region
    _
  $region17: #{transformer_decoder_unit.10} parent=0 // pred_fallthru
    _
  // Predicated region
  $region18: #{transformer_decoder_unit.10} parent=0 // pred_check
    _
  $region19: #{transformer_decoder_unit.10} parent=0 // pred_check_branch
    %20 = sbr.rel (0) target = $region21
  $region20: #{transformer_decoder_unit.10} parent=0 // pred_region
    _
  $region21: #{transformer_decoder_unit.10} parent=0 // pred_fallthru
    _
  // Predicated region
  $region22: #{transformer_decoder_unit.10} parent=0 // pred_check
    _
  $region23: #{transformer_decoder_unit.10} parent=0 // pred_check_branch
    %22 = sbr.rel (0) target = $region25
  $region24: #{transformer_decoder_unit.10} parent=0 // pred_region
    _
  $region25: #{transformer_decoder_unit.10} parent=0 // pred_fallthru
    _
  %p24 = scmp.eq.s32.totalorder 0, 0
  // Predicated region
  $region26: #{transformer_decoder_unit.10} parent=0 // pred_check
    %p25 = pneg %p24
  $region27: #{transformer_decoder_unit.10} parent=0 // pred_check_branch
    %27 = sbr.rel (%p25) target = $region29
  $region28: #{transformer_decoder_unit.10} parent=0 // pred_region
    %vm28 = vcmask 261120
    %29 = vst.msk [vmem:[#allocation2] sm:$0xff] %vm28, 0.0
    %30 = vst.msk [vmem:[#allocation2 + $0x8] sm:$0xff] %vm28, 0.0
  $region29: #{transformer_decoder_unit.10} parent=0 // pred_fallthru
    _
  %v31 = vld [vmem:[#allocation2] sm:$0xff]
  %v32 = vld [vmem:[#allocation2 + $0x8] sm:$0xff]
  %v33 = vld [vmem:[%s0] sm:$0xf]
  %v34 = vld [vmem:[%s0 + $0x4] sm:$0xf]
  %v35 = vld [vmem:[%s1] sm:$0xf]
  %v36 = vld [vmem:[%s1 + $0x4] sm:$0xf]
  %v37 = vld [vmem:[%s1 + $0x8] sm:$0xf]
  %v38 = vld [vmem:[%s1 + $0xc] sm:$0xf]
  %v41 = vunpack.c.l.b16 %v33
  %v42 = vunpack.c.l.b16 %v34
  %v43 = vpack.c.b16 %v42, %v41
  %v48 = vunpack.c.l.b16 %v35
  %v49 = vunpack.c.l.b16 %v36
  %v50 = vunpack.c.l.b16 %v37
  %v51 = vunpack.c.l.b16 %v38
  %v52 = vpack.c.b16 %v49, %v48
  %v53 = vpack.c.b16 %v51, %v50
  %vm56 = vcmask 261120
  %v58 = vsel %vm56, %v43, 0
  %60 = vmatpush.bf16.msra.mxu0 0
  %61 = vmatpush.bf16.msra.mxu0 0
  %62 = vmatpush.bf16.msra.mxu0 0
  %63 = vmatpush.bf16.msra.mxu0 0
  %64 = vmatpush.bf16.msra.mxu0 0
  %65 = vmatpush.bf16.msra.mxu0 0
  %66 = vmatpush.bf16.msra.mxu0 %v53
  %67 = vmatpush.bf16.msra.mxu0 %v52
  %68 = vmatmul.bf16.gmra.mxu0 %v58
  %v69 = vpop.f32.mrf.mxu0
  %v70 = vadd.f32 0.0, %v69
  %v71 = vpop.f32.mrf.mxu0
  %v72 = vadd.f32 0.0, %v71
  %73 = vdwg.mxu0
  %v74 = vadd.f32 %v31, %v70
  %v75 = vadd.f32 %v32, %v72
  %76 = vst.msk [vmem:[#allocation2] sm:$0xff] %vm56, %v74
  %77 = vst.msk [vmem:[#allocation2 + $0x8] sm:$0xff] %vm56, %v75
  // Predicated region
  $region30: #{transformer_decoder_unit.10} parent=0 // pred_check
    %p78 = pneg %p24
  $region31: #{transformer_decoder_unit.10} parent=0 // pred_check_branch
    %80 = sbr.rel (%p78) target = $region33
  $region32: #{transformer_decoder_unit.10} parent=0 // pred_region
    %v81 = vld [vmem:[#allocation2] sm:$0xff]
    %v82 = vld [vmem:[#allocation2 + $0x8] sm:$0xff]
    %v83 = vld [vmem:[%s2] sm:$0x1]
    %v85 = vperm.slane %v83, 0
    %v87 = vadd.f32 %v81, %v85
    %v88 = vadd.f32 %v82, %v85
    %v89 = vld [vmem:[%s3] sm:$0xf]
    %v90 = vld [vmem:[%s3 + $0x4] sm:$0xf]
    %v91 = vunpack.c.l.bf16 %v89
    %v92 = vunpack.c.l.bf16 %v90
    %v93 = vadd.f32 %v87, %v91
    %v94 = vadd.f32 %v88, %v92
    %v95 = vsel %vm56, %v93, 0.0
    %96 = vadd.xlane.f32.xlu0 %v95
    %v97 = vpop.xlane.xlu0 %96
    %v98 = vsel %vm56, %v94, 0.0
    %99 = vadd.xlane.f32.xlu0 %v98
    %v100 = vpop.xlane.xlu0 %99
    %v101 = vrcp.pop 32.0
    %v102 = vmul.f32 32.0, %v101
    %v103 = vsub.f32 1.0, %v102
    %v104 = vmul.f32 %v101, %v103
    %v105 = vadd.f32 %v101, %v104
    %vm106 = vweird.f32 %v101
    %v107 = vsel %vm106, %v101, %v105
    %v108 = vmul.f32 %v97, %v107
    %v109 = vmul.f32 %v100, %v107
    %v110 = vmul.f32 %v93, %v93
    %v111 = vmul.f32 %v94, %v94
    %v112 = vsel %vm56, %v110, 0.0
    %113 = vadd.xlane.f32.xlu0 %v112
    %v114 = vpop.xlane.xlu0 %113
    %v115 = vsel %vm56, %v111, 0.0
    %116 = vadd.xlane.f32.xlu0 %v115
    %v117 = vpop.xlane.xlu0 %116
    %v118 = vmul.f32 %v114, %v107
    %v119 = vmul.f32 %v117, %v107
    %v120 = vmul.f32 %v108, %v108
    %v121 = vmul.f32 %v109, %v109
    %v122 = vsub.f32 %v118, %v120
    %v123 = vsub.f32 %v119, %v121
    %v124 = vadd.f32 %v122, 1e-05
    %v125 = vadd.f32 %v123, 1e-05
    %v126 = vrsqrt.pop %v124
    %v127 = vmul.f32 %v126, %v124
    %v128 = vmul.f32 %v127, %v126
    %v129 = vmul.f32 0.5, %v128
    %v130 = vsub.f32 1.5, %v129
    %v131 = vmul.f32 %v126, %v130
    %vm132 = vweird.f32 %v124
    %vm133 = vweird.f32 %v126
    %vm134 = vmor %vm132, %vm133
    %v135 = vsel %vm134, %v126, %v131
    %v136 = vrsqrt.pop %v125
    %v137 = vmul.f32 %v136, %v125
    %v138 = vmul.f32 %v137, %v136
    %v139 = vmul.f32 0.5, %v138
    %v140 = vsub.f32 1.5, %v139
    %v141 = vmul.f32 %v136, %v140
    %vm142 = vweird.f32 %v125
    %vm143 = vweird.f32 %v136
    %vm144 = vmor %vm142, %vm143
    %v145 = vsel %vm144, %v136, %v141
    %v146 = vsub.f32 %v93, %v108
    %v147 = vsub.f32 %v94, %v109
    %v148 = vmul.f32 %v146, %v135
    %v149 = vmul.f32 %v147, %v145
    %v150 = vld [vmem:[%s4] sm:$0x1]
    %v152 = vperm.slane %v150, 0
    %v154 = vmul.f32 %v148, %v152
    %v155 = vmul.f32 %v149, %v152
    %v156 = vld [vmem:[%s5] sm:$0x1]
    %v158 = vperm.slane %v156, 0
    %v160 = vadd.f32 %v154, %v158
    %v161 = vadd.f32 %v155, %v158
    %v162 = vpack.c.bf16 %v160, %v160
    %v163 = vpack.c.bf16 %v161, %v161
    %vm164 = vcmask 257024
    %165 = vst.msk [vmem:[%s6] sm:$0xf] %vm164, %v162
    %166 = vst.msk [vmem:[%s6 + $0x4] sm:$0xf] %vm164, %v163
  $region33: #{transformer_decoder_unit.10} parent=0 // pred_fallthru
    _
  // Predicated region
  $region34: #{transformer_decoder_unit.10} parent=0 // pred_check
    _
  $region35: #{transformer_decoder_unit.10} parent=0 // pred_check_branch
    %168 = sbr.rel (0) target = $region37
  $region36: #{transformer_decoder_unit.10} parent=0 // pred_region
    _
  $region37: #{transformer_decoder_unit.10} parent=0 // pred_fallthru
    _
  // Predicated region
  $region38: #{transformer_decoder_unit.10} parent=0 // pred_check
    _
  $region39: #{transformer_decoder_unit.10} parent=0 // pred_check_branch
    %170 = sbr.rel (0) target = $region41
  $region40: #{transformer_decoder_unit.10} parent=0 // pred_region
    _
  $region41: #{transformer_decoder_unit.10} parent=0 // pred_fallthru
    _

// kernel: transformer_decoder_unit.13
$region0: #{transformer_decoder_unit.13}
  #allocation0 [shape = 'u32[]', space=smem, size = 0x4, offset = 0x4, fixed_abs, tag = 'smem constant byte address 0x4 - core index']
  #allocation1 [shape = 'u32[72,128]{1,0:T(1,128)}', space=vmem, size = 0x9000, scoped, tag = 'internal scratch']
  %s0 = inlined_call_operand.vmem [shape: bf16[2,8,8,4], index: 0, kind: input, shape index: {}]
  %s1 = inlined_call_operand.vmem [shape: bf16[2,8,8,4], index: 1, kind: input, shape index: {}]
  %s2 = inlined_call_operand.vmem [shape: bf16[2,8,8,4], index: 2, kind: input, shape index: {}]
  %s3 = inlined_call_operand.vmem [shape: bf16[2,8,8,4], index: 3, kind: output, shape index: {}]
  %s4 = sld [smem:[#allocation0]]
  $region45: #{transformer_decoder_unit.13} parent=0
    _
  %s6 = ssub.s32 1, %s4
  %s7 = scalar_select 0, %s6, %s4
  loop: start=0, step=1, limit=18
  $region2: #{transformer_decoder_unit.13} parent=0 // loop_pre_header
    _
  $region3: #{transformer_decoder_unit.13} parent=0 // loop_header
    %s9 = sphi 0, %s13
    %p10 = scmp.ge.s32.totalorder %s9, 18
    %s16 = sphi 0, %s28
    %s17 = sphi 0, %s24
    %s18 = sphi 0, %s16
    %s19 = sphi 0, %s17
    %s20 = sphi 0, %s18
    %s21 = sphi 0, %s19
    %s33 = sphi 0, %s35
    %s36 = sphi 0, %s33
    %s37 = sphi 0, %s36
    %s53 = sphi 0, %s37
    %s61 = sphi 0, %s63
    %s64 = sphi 0, %s61
    %s65 = sphi 0, %s64
    %s81 = sphi 0, %s65
    %s89 = sphi 0, %s91
    %s92 = sphi 0, %s89
    %s93 = sphi 0, %s92
    %s109 = sphi 0, %s93
    %s117 = sphi 0, %s119
    %s120 = sphi 0, %s117
    %s121 = sphi 0, %s120
    %s137 = sphi 0, %s121
  $region4: #{transformer_decoder_unit.13} parent=0 // loop_header_branch
    %12 = sbr.rel (%p10) target = $region8
  $region5: #{transformer_decoder_unit.13} parent=0 // loop_body
    %s14 = ssub.s32 %s9, 1
    %s15 = ssub.s32 %s9, 2
    %s22 = sadd.s32 1, %s17
    %p23 = scmp.ge.s32.totalorder %s22, 8
    %s24 = scalar_select %p23, 0, %s22
    %s25 = sadd.s32 1, %s16
    %s26 = scalar_select %p23, %s25, %s16
    %p27 = scmp.ge.s32.totalorder %s26, 2
    %s28 = scalar_select %p27, 0, %s26
    %s29 = ssub.s32 %s16, %s28
    %s30 = ssub.s32 %s17, %s24
    %s31 = sor.u32 %s29, %s30
    %p32 = scmp.eq.s32.totalorder %s31, 0
    %s34 = sadd.s32 %s33, 1
    %s35 = scalar_select %p32, %s33, %s34
    %p38 = pneg %p32
    %p39 = scmp.eq.s32.totalorder %s9, 15
    %p40 = por %p38, %p39
    %p41 = scmp.ne.s32.totalorder %s33, %s36
    %p42 = scmp.eq.s32.totalorder %s9, 0
    %p43 = por %p41, %p42
    %p44 = scmp.ne.s32.totalorder %s33, %s36
    %p45 = scmp.eq.s32.totalorder %s14, 15
    %p46 = por %p44, %p45
    %p47 = scmp.ne.s32.totalorder %s36, %s37
    %p48 = scmp.eq.s32.totalorder %s14, 0
    %p49 = por %p47, %p48
    %p50 = scmp.ne.s32.totalorder %s36, %s37
    %p51 = scmp.eq.s32.totalorder %s15, 15
    %p52 = por %p50, %p51
    %p54 = scmp.ne.s32.totalorder %s37, %s53
    %p55 = scmp.eq.s32.totalorder %s15, 0
    %p56 = por %p54, %p55
    %s57 = ssub.s32 %s16, %s28
    %s58 = ssub.s32 %s17, %s24
    %s59 = sor.u32 %s57, %s58
    %p60 = scmp.eq.s32.totalorder %s59, 0
    %s62 = sadd.s32 %s61, 1
    %s63 = scalar_select %p60, %s61, %s62
    %p66 = pneg %p60
    %p67 = scmp.eq.s32.totalorder %s9, 15
    %p68 = por %p66, %p67
    %p69 = scmp.ne.s32.totalorder %s61, %s64
    %p70 = scmp.eq.s32.totalorder %s9, 0
    %p71 = por %p69, %p70
    %p72 = scmp.ne.s32.totalorder %s61, %s64
    %p73 = scmp.eq.s32.totalorder %s14, 15
    %p74 = por %p72, %p73
    %p75 = scmp.ne.s32.totalorder %s64, %s65
    %p76 = scmp.eq.s32.totalorder %s14, 0
    %p77 = por %p75, %p76
    %p78 = scmp.ne.s32.totalorder %s64, %s65
    %p79 = scmp.eq.s32.totalorder %s15, 15
    %p80 = por %p78, %p79
    %p82 = scmp.ne.s32.totalorder %s65, %s81
    %p83 = scmp.eq.s32.totalorder %s15, 0
    %p84 = por %p82, %p83
    %s85 = ssub.s32 %s16, %s28
    %s86 = ssub.s32 %s17, %s24
    %s87 = sor.u32 %s85, %s86
    %p88 = scmp.eq.s32.totalorder %s87, 0
    %s90 = sadd.s32 %s89, 1
    %s91 = scalar_select %p88, %s89, %s90
    %p94 = pneg %p88
    %p95 = scmp.eq.s32.totalorder %s9, 15
    %p96 = por %p94, %p95
    %p97 = scmp.ne.s32.totalorder %s89, %s92
    %p98 = scmp.eq.s32.totalorder %s9, 0
    %p99 = por %p97, %p98
    %p100 = scmp.ne.s32.totalorder %s89, %s92
    %p101 = scmp.eq.s32.totalorder %s14, 15
    %p102 = por %p100, %p101
    %p103 = scmp.ne.s32.totalorder %s92, %s93
    %p104 = scmp.eq.s32.totalorder %s14, 0
    %p105 = por %p103, %p104
    %p106 = scmp.ne.s32.totalorder %s92, %s93
    %p107 = scmp.eq.s32.totalorder %s15, 15
    %p108 = por %p106, %p107
    %p110 = scmp.ne.s32.totalorder %s93, %s109
    %p111 = scmp.eq.s32.totalorder %s15, 0
    %p112 = por %p110, %p111
    %s113 = ssub.s32 %s16, %s28
    %s114 = ssub.s32 %s17, %s24
    %s115 = sor.u32 %s113, %s114
    %p116 = scmp.eq.s32.totalorder %s115, 0
    %s118 = sadd.s32 %s117, 1
    %s119 = scalar_select %p116, %s117, %s118
    %p122 = pneg %p116
    %p123 = scmp.eq.s32.totalorder %s9, 15
    %p124 = por %p122, %p123
    %p125 = scmp.ne.s32.totalorder %s117, %s120
    %p126 = scmp.eq.s32.totalorder %s9, 0
    %p127 = por %p125, %p126
    %p128 = scmp.ne.s32.totalorder %s117, %s120
    %p129 = scmp.eq.s32.totalorder %s14, 15
    %p130 = por %p128, %p129
    %p131 = scmp.ne.s32.totalorder %s120, %s121
    %p132 = scmp.eq.s32.totalorder %s14, 0
    %p133 = por %p131, %p132
    %p134 = scmp.ne.s32.totalorder %s120, %s121
    %p135 = scmp.eq.s32.totalorder %s15, 15
    %p136 = por %p134, %p135
    %p138 = scmp.ne.s32.totalorder %s121, %s137
    %p139 = scmp.eq.s32.totalorder %s15, 0
    %p140 = por %p138, %p139
    %p141 = scmp.le.s32.totalorder 1, %s9
    %p142 = scmp.lt.s32.totalorder %s9, 17
    %p143 = pnand %p141, %p142
    %p144 = pneg %p143
    // Predicated region
    $region9: #{transformer_decoder_unit.13} parent=5 // pred_check
      _
    $region10: #{transformer_decoder_unit.13} parent=5 // pred_check_branch
      %146 = sbr.rel (%p143) target = $region12
    $region11: #{transformer_decoder_unit.13} parent=5 // pred_region
      %s147 = ssub.s32 %s9, 1
    $region12: #{transformer_decoder_unit.13} parent=5 // pred_fallthru
      _
    %p148 = scmp.lt.s32.totalorder %s9, 16
    // Predicated region
    $region13: #{transformer_decoder_unit.13} parent=5 // pred_check
      %p149 = pneg %p148
    $region14: #{transformer_decoder_unit.13} parent=5 // pred_check_branch
      %151 = sbr.rel (%p149) target = $region16
    $region15: #{transformer_decoder_unit.13} parent=5 // pred_region
      // Predicated region
      $region17: #{transformer_decoder_unit.13} parent=15 // pred_check
        %p152 = pneg %p43
      $region18: #{transformer_decoder_unit.13} parent=15 // pred_check_branch
        %154 = sbr.rel (%p152) target = $region20
      $region19: #{transformer_decoder_unit.13} parent=15 // pred_region
        %p155 = scmp.lt.s32.totalorder %s16, 1
        %s156 = scalar_select %p155, %s16, 1
        %p157 = scmp.lt.s32.totalorder %s17, 7
        %s158 = scalar_select %p157, %s17, 7
        %s159 = smul.addr %s156, 8
        %s160 = sadd.s32 %s158, %s159
        %s161 = smul.addr %s160, 4
        %s162 = scalar_lea.vmem %s0, %s161
      $region20: #{transformer_decoder_unit.13} parent=15 // pred_fallthru
        _
      // Predicated region
      $region21: #{transformer_decoder_unit.13} parent=15 // pred_check
        %p163 = pneg %p71
      $region22: #{transformer_decoder_unit.13} parent=15 // pred_check_branch
        %165 = sbr.rel (%p163) target = $region24
      $region23: #{transformer_decoder_unit.13} parent=15 // pred_region
        %p166 = scmp.lt.s32.totalorder %s16, 1
        %s167 = scalar_select %p166, %s16, 1
        %p168 = scmp.lt.s32.totalorder %s17, 7
        %s169 = scalar_select %p168, %s17, 7
        %s170 = smul.addr %s167, 8
        %s171 = sadd.s32 %s169, %s170
        %s172 = smul.addr %s171, 4
        %s173 = scalar_lea.vmem %s1, %s172
      $region24: #{transformer_decoder_unit.13} parent=15 // pred_fallthru
        _
      // Predicated region
      $region25: #{transformer_decoder_unit.13} parent=15 // pred_check
        %p174 = pneg %p99
      $region26: #{transformer_decoder_unit.13} parent=15 // pred_check_branch
        %176 = sbr.rel (%p174) target = $region28
      $region27: #{transformer_decoder_unit.13} parent=15 // pred_region
        %p177 = scmp.lt.s32.totalorder %s16, 1
        %s178 = scalar_select %p177, %s16, 1
        %p179 = scmp.lt.s32.totalorder %s17, 7
        %s180 = scalar_select %p179, %s17, 7
        %s181 = smul.addr %s178, 8
        %s182 = sadd.s32 %s180, %s181
        %s183 = smul.addr %s182, 4
        %s184 = scalar_lea.vmem %s2, %s183
      $region28: #{transformer_decoder_unit.13} parent=15 // pred_fallthru
        _
    $region16: #{transformer_decoder_unit.13} parent=5 // pred_fallthru
      _
    %p185 = scmp.le.s32.totalorder 1, %s9
    %p186 = scmp.lt.s32.totalorder %s9, 17
    %p187 = pnand %p185, %p186
    %p188 = pneg %p187
    // Predicated region
    $region29: #{transformer_decoder_unit.13} parent=5 // pred_check
      _
    $region30: #{transformer_decoder_unit.13} parent=5 // pred_check_branch
      %190 = sbr.rel (%p187) target = $region32
    $region31: #{transformer_decoder_unit.13} parent=5 // pred_region
      %s191 = ssub.s32 %s9, 1
      %p192 = scmp.lt.s32.totalorder %s18, 1
      %s193 = scalar_select %p192, %s18, 1
      %p194 = scmp.lt.s32.totalorder %s19, 7
      %s195 = scalar_select %p194, %s19, 7
      %s196 = smul.addr %s193, 8
      %s197 = sadd.s32 %s195, %s196
      %s198 = smul.addr %s197, 4
      %s199 = scalar_lea.vmem %s0, %s198
      %p200 = pneg %p49
      %p201 = pneg %p46
      %p202 = scmp.lt.s32.totalorder %s18, 1
      %s203 = scalar_select %p202, %s18, 1
      %p204 = scmp.lt.s32.totalorder %s19, 7
      %s205 = scalar_select %p204, %s19, 7
      %s206 = smul.addr %s203, 8
      %s207 = sadd.s32 %s205, %s206
      %s208 = smul.addr %s207, 4
      %s209 = scalar_lea.vmem %s1, %s208
      %p210 = pneg %p77
      %p211 = pneg %p74
      %p212 = scmp.lt.s32.totalorder %s18, 1
      %s213 = scalar_select %p212, %s18, 1
      %p214 = scmp.lt.s32.totalorder %s19, 7
      %s215 = scalar_select %p214, %s19, 7
      %s216 = smul.addr %s213, 8
      %s217 = sadd.s32 %s215, %s216
      %s218 = smul.addr %s217, 4
      %s219 = scalar_lea.vmem %s2, %s218
      %p220 = pneg %p105
      %p221 = pneg %p102
      %p222 = pneg %p133
      %p223 = pneg %p130
      %p224 = scmp.lt.s32.totalorder %s18, 1
      %s225 = scalar_select %p224, %s18, 1
      %p226 = scmp.lt.s32.totalorder %s19, 7
      %s227 = scalar_select %p226, %s19, 7
      %s228 = smul.addr %s225, 8
      %s229 = sadd.s32 %s227, %s228
      %s230 = smul.addr %s229, 4
      %s231 = scalar_lea.vmem %s3, %s230
      %p232 = scmp.lt.s32.totalorder %s18, 1
      %s233 = scalar_select %p232, %s18, 1
      %p234 = scmp.lt.s32.totalorder %s19, 7
      %s235 = scalar_select %p234, %s19, 7
      %s236 = smul.addr %s233, 8
      %s237 = sadd.s32 %s235, %s236
      %s238 = smul.addr %s237, 4
      %s239 = scalar_lea.vmem %s0, %s238
      %p240 = scmp.lt.s32.totalorder %s18, 1
      %s241 = scalar_select %p240, %s18, 1
      %p242 = scmp.lt.s32.totalorder %s19, 7
      %s243 = scalar_select %p242, %s19, 7
      %s244 = smul.addr %s241, 8
      %s245 = sadd.s32 %s243, %s244
      %s246 = smul.addr %s245, 4
      %s247 = scalar_lea.vmem %s1, %s246
      %p248 = scmp.lt.s32.totalorder %s18, 1
      %s249 = scalar_select %p248, %s18, 1
      %p250 = scmp.lt.s32.totalorder %s19, 7
      %s251 = scalar_select %p250, %s19, 7
      %s252 = smul.addr %s249, 8
      %s253 = sadd.s32 %s251, %s252
      %s254 = smul.addr %s253, 4
      %s255 = scalar_lea.vmem %s2, %s254
      %p256 = scmp.lt.s32.totalorder %s18, 1
      %s257 = scalar_select %p256, %s18, 1
      %p258 = scmp.lt.s32.totalorder %s19, 7
      %s259 = scalar_select %p258, %s19, 7
      %s260 = smul.addr %s257, 8
      %s261 = sadd.s32 %s259, %s260
      %s262 = smul.addr %s261, 4
      %s263 = scalar_lea.vmem %s3, %s262
      %v265 = vld [vmem:[%s239] sm:$0xf]
      %v266 = vld [vmem:[%s247] sm:$0xf]
      %v267 = vld [vmem:[%s255] sm:$0xf]
      %vm268 = vcmask 31744
      %v270 = vsel %vm268, %v265, 0
      %v273 = vsel %vm268, %v266, 0
      %275 = vmatpush.bf16.xpose.msra.mxu0 0
      %276 = vmatpush.bf16.xpose.msra.mxu0 0
      %277 = vmatpush.bf16.xpose.msra.mxu0 0
      %278 = vmatpush.bf16.xpose.msra.mxu0 0
      %279 = vmatpush.bf16.xpose.msra.mxu0 0
      %280 = vmatpush.bf16.xpose.msra.mxu0 0
      %281 = vmatpush.bf16.xpose.msra.mxu0 0
      %282 = vmatpush.bf16.xpose.msra.mxu0 %v273
      %283 = vmatmul.bf16.gmra.mxu0 %v270
      %v284 = vpop.f32.mrf.mxu0
      %v285 = vadd.f32 0.0, %v284
      %v286 = vpop.f32.mrf.mxu0
      %287 = vdwg.mxu0
      %v288 = vmul.f32 %v285, 0.5
      %vm289 = vcmask 64512
      %v290 = vsel %vm289, %v288, -inf
      %291 = vmax.xlane.f32.xlu0 %v290
      %v292 = vpop.xlane.xlu0 %291
      %v293 = vsub.f32 %v288, %v292
      %v294 = vmul.f32 %v293, 1.442695
      %v295 = vpow.pop %v294
      %v296 = vsel %vm289, %v295, 0.0
      %297 = vadd.xlane.f32.xlu0 %v296
      %v298 = vpop.xlane.xlu0 %297
      %v299 = vpack.c.bf16 %v295, %v295
      %v301 = vsel %vm289, %v299, 0
      %vm303 = vcmask 1043456
      %v305 = vsel %vm303, %v267, 0
      %307 = vmatpush.bf16.msra.mxu0 0
      %308 = vmatpush.bf16.msra.mxu0 0
      %309 = vmatpush.bf16.msra.mxu0 0
      %310 = vmatpush.bf16.msra.mxu0 0
      %311 = vmatpush.bf16.msra.mxu0 0
      %312 = vmatpush.bf16.msra.mxu0 0
      %313 = vmatpush.bf16.msra.mxu0 0
      %314 = vmatpush.bf16.msra.mxu0 %v305
      %315 = vmatmul.bf16.gmra.mxu0 %v301
      %v316 = vpop.f32.mrf.mxu0
      %v317 = vadd.f32 0.0, %v316
      %v318 = vpop.f32.mrf.mxu0
      %319 = vdwg.mxu0
      %v320 = vrcp.pop %v298
      %v321 = vmul.f32 %v298, %v320
      %v322 = vsub.f32 1.0, %v321
      %v323 = vmul.f32 %v320, %v322
      %v324 = vadd.f32 %v320, %v323
      %vm325 = vweird.f32 %v298
      %vm326 = vweird.f32 %v320
      %vm327 = vmor %vm325, %vm326
      %v328 = vsel %vm327, %v320, %v324
      %v329 = vand.u32 2147483647, %v298
      %vm330 = vcmp.eq.f32.partialorder %v329, 8.507059e+37
      %v331 = vand.u32 %v298, 2147483648
      %v332 = vor.u32 1.1754944e-38, %v331
      %v333 = vsel %vm330, %v332, %v328
      %v334 = vmul.f32 %v317, %v333
      %v335 = vpack.c.bf16 %v334, %v334
      %vm336 = vcmask 27648
      %337 = vst.msk [vmem:[%s263] sm:$0xf] %vm336, %v335
      %p338 = scmp.lt.s32.totalorder %s18, 1
      %s339 = scalar_select %p338, %s18, 1
      %p340 = scmp.lt.s32.totalorder %s19, 7
      %s341 = scalar_select %p340, %s19, 7
      %s342 = smul.addr %s339, 8
      %s343 = sadd.s32 %s341, %s342
      %s344 = smul.addr %s343, 4
      %s345 = scalar_lea.vmem %s3, %s344
      // Predicated region
      $region33: #{transformer_decoder_unit.13} parent=31 // pred_check
        %p346 = pneg %p130
      $region34: #{transformer_decoder_unit.13} parent=31 // pred_check_branch
        %348 = sbr.rel (%p346) target = $region36
      $region35: #{transformer_decoder_unit.13} parent=31 // pred_region
        _
      $region36: #{transformer_decoder_unit.13} parent=31 // pred_fallthru
        _
    $region32: #{transformer_decoder_unit.13} parent=5 // pred_fallthru
      _
    %p349 = scmp.le.s32.totalorder 2, %s9
    // Predicated region
    $region37: #{transformer_decoder_unit.13} parent=5 // pred_check
      %p350 = pneg %p349
    $region38: #{transformer_decoder_unit.13} parent=5 // pred_check_branch
      %352 = sbr.rel (%p350) target = $region40
    $region39: #{transformer_decoder_unit.13} parent=5 // pred_region
      %s353 = ssub.s32 %s9, 2
      // Predicated region
      $region41: #{transformer_decoder_unit.13} parent=39 // pred_check
        %p354 = pneg %p136
      $region42: #{transformer_decoder_unit.13} parent=39 // pred_check_branch
        %356 = sbr.rel (%p354) target = $region44
      $region43: #{transformer_decoder_unit.13} parent=39 // pred_region
        %p357 = scmp.lt.s32.totalorder %s20, 1
        %s358 = scalar_select %p357, %s20, 1
        %p359 = scmp.lt.s32.totalorder %s21, 7
        %s360 = scalar_select %p359, %s21, 7
        %s361 = smul.addr %s358, 8
        %s362 = sadd.s32 %s360, %s361
        %s363 = smul.addr %s362, 4
        %s364 = scalar_lea.vmem %s3, %s363
      $region44: #{transformer_decoder_unit.13} parent=39 // pred_fallthru
        _
    $region40: #{transformer_decoder_unit.13} parent=5 // pred_fallthru
      _
  $region6: #{transformer_decoder_unit.13} parent=0 // loop_footer
    %s13 = sadd.s32 1, %s9
  $region7: #{transformer_decoder_unit.13} parent=0 // loop_footer_branch
    %8 = sbr.rel target = $region3
  $region8: #{transformer_decoder_unit.13} parent=0 // loop_exit
    _

// kernel: transformer_decoder_unit.12
$region0: #{transformer_decoder_unit.12}
  #allocation0 [shape = 'u32[]', space=smem, size = 0x4, offset = 0x4, fixed_abs, tag = 'smem constant byte address 0x4 - core index']
  #allocation1 [shape = 'u32[72,128]{1,0:T(1,128)}', space=vmem, size = 0x9000, scoped, tag = 'internal scratch']
  #allocation2 [shape = 'f32[16,64]{1,0:T(8,128)}', space=vmem, size = 0x2000, scoped, tag = 'scratch operand']
  %s0 = inlined_call_operand.vmem [shape: bf16[16,32], index: 0, kind: input, shape index: {}]
  %s1 = inlined_call_operand.vmem [shape: bf16[32,64], index: 1, kind: input, shape index: {}]
  %s2 = inlined_call_operand.vmem [shape: f32[1,64], index: 2, kind: input, shape index: {}]
  %s3 = inlined_call_operand.vmem [shape: bf16[16,64], index: 3, kind: output, shape index: {}]
  %s4 = sld [smem:[#allocation0]]
  $region30: #{transformer_decoder_unit.12} parent=0
    _
  %s6 = ssub.s32 1, %s4
  %s7 = scalar_select 0, %s6, %s4
  // Predicated region
  $region2: #{transformer_decoder_unit.12} parent=0 // pred_check
    _
  $region3: #{transformer_decoder_unit.12} parent=0 // pred_check_branch
    %9 = sbr.rel (0) target = $region5
  $region4: #{transformer_decoder_unit.12} parent=0 // pred_region
    _
  $region5: #{transformer_decoder_unit.12} parent=0 // pred_fallthru
    _
  // Predicated region
  $region6: #{transformer_decoder_unit.12} parent=0 // pred_check
    _
  $region7: #{transformer_decoder_unit.12} parent=0 // pred_check_branch
    %11 = sbr.rel (0) target = $region9
  $region8: #{transformer_decoder_unit.12} parent=0 // pred_region
    _
  $region9: #{transformer_decoder_unit.12} parent=0 // pred_fallthru
    _
  // Predicated region
  $region10: #{transformer_decoder_unit.12} parent=0 // pred_check
    _
  $region11: #{transformer_decoder_unit.12} parent=0 // pred_check_branch
    %13 = sbr.rel (0) target = $region13
  $region12: #{transformer_decoder_unit.12} parent=0 // pred_region
    _
  $region13: #{transformer_decoder_unit.12} parent=0 // pred_fallthru
    _
  %p15 = scmp.eq.s32.totalorder 0, 0
  // Predicated region
  $region14: #{transformer_decoder_unit.12} parent=0 // pred_check
    %p16 = pneg %p15
  $region15: #{transformer_decoder_unit.12} parent=0 // pred_check_branch
    %18 = sbr.rel (%p16) target = $region17
  $region16: #{transformer_decoder_unit.12} parent=0 // pred_region
    %vm19 = vcmask 523264
    %20 = vst.msk [vmem:[#allocation2] sm:$0xff] %vm19, 0.0
    %21 = vst.msk [vmem:[#allocation2 + $0x8] sm:$0xff] %vm19, 0.0
  $region17: #{transformer_decoder_unit.12} parent=0 // pred_fallthru
    _
  %v22 = vld [vmem:[#allocation2] sm:$0xff]
  %v23 = vld [vmem:[#allocation2 + $0x8] sm:$0xff]
  %v24 = vld [vmem:[%s0] sm:$0xf]
  %v25 = vld [vmem:[%s0 + $0x4] sm:$0xf]
  %v26 = vld [vmem:[%s1] sm:$0xf]
  %v27 = vld [vmem:[%s1 + $0x4] sm:$0xf]
  %v28 = vld [vmem:[%s1 + $0x8] sm:$0xf]
  %v29 = vld [vmem:[%s1 + $0xc] sm:$0xf]
  %v32 = vunpack.c.l.b16 %v24
  %v33 = vunpack.c.l.b16 %v25
  %v34 = vpack.c.b16 %v33, %v32
  %v39 = vunpack.c.l.b16 %v26
  %v40 = vunpack.c.l.b16 %v27
  %v41 = vunpack.c.l.b16 %v28
  %v42 = vunpack.c.l.b16 %v29
  %v43 = vpack.c.b16 %v40, %v39
  %v44 = vpack.c.b16 %v42, %v41
  %vm47 = vcmask 261120
  %v49 = vsel %vm47, %v34, 0
  %51 = vmatpush.bf16.msra.mxu0 0
  %52 = vmatpush.bf16.msra.mxu0 0
  %53 = vmatpush.bf16.msra.mxu0 0
  %54 = vmatpush.bf16.msra.mxu0 0
  %55 = vmatpush.bf16.msra.mxu0 0
  %56 = vmatpush.bf16.msra.mxu0 0
  %57 = vmatpush.bf16.msra.mxu0 %v44
  %58 = vmatpush.bf16.msra.mxu0 %v43
  %59 = vmatmul.bf16.gmra.mxu0 %v49
  %v60 = vpop.f32.mrf.mxu0
  %v61 = vadd.f32 0.0, %v60
  %v62 = vpop.f32.mrf.mxu0
  %v63 = vadd.f32 0.0, %v62
  %64 = vdwg.mxu0
  %v65 = vadd.f32 %v22, %v61
  %v66 = vadd.f32 %v23, %v63
  %vm67 = vcmask 523264
  %68 = vst.msk [vmem:[#allocation2] sm:$0xff] %vm67, %v65
  %69 = vst.msk [vmem:[#allocation2 + $0x8] sm:$0xff] %vm67, %v66
  // Predicated region
  $region18: #{transformer_decoder_unit.12} parent=0 // pred_check
    %p70 = pneg %p15
  $region19: #{transformer_decoder_unit.12} parent=0 // pred_check_branch
    %72 = sbr.rel (%p70) target = $region21
  $region20: #{transformer_decoder_unit.12} parent=0 // pred_region
    %v73 = vld [vmem:[#allocation2] sm:$0xff]
    %v74 = vld [vmem:[#allocation2 + $0x8] sm:$0xff]
    %v75 = vld [vmem:[%s2] sm:$0x1]
    %v77 = vperm.slane %v75, 0
    %v79 = vadd.f32 %v73, %v77
    %v80 = vadd.f32 %v74, %v77
    %v81 = vpack.c.bf16 %v79, %v79
    %v82 = vpack.c.bf16 %v80, %v80
    %vm83 = vcmask 519168
    %84 = vst.msk [vmem:[%s3] sm:$0xf] %vm83, %v81
    %85 = vst.msk [vmem:[%s3 + $0x4] sm:$0xf] %vm83, %v82
  $region21: #{transformer_decoder_unit.12} parent=0 // pred_fallthru
    _
  // Predicated region
  $region22: #{transformer_decoder_unit.12} parent=0 // pred_check
    _
  $region23: #{transformer_decoder_unit.12} parent=0 // pred_check_branch
    %87 = sbr.rel (0) target = $region25
  $region24: #{transformer_decoder_unit.12} parent=0 // pred_region
    _
  $region25: #{transformer_decoder_unit.12} parent=0 // pred_fallthru
    _
  // Predicated region
  $region26: #{transformer_decoder_unit.12} parent=0 // pred_check
    _
  $region27: #{transformer_decoder_unit.12} parent=0 // pred_check_branch
    %89 = sbr.rel (0) target = $region29
  $region28: #{transformer_decoder_unit.12} parent=0 // pred_region
    _
  $region29: #{transformer_decoder_unit.12} parent=0 // pred_fallthru
    _

// kernel: transformer_decoder_unit.15
$region0: #{transformer_decoder_unit.15}
  #allocation0 [shape = 'u32[]', space=smem, size = 0x4, offset = 0x4, fixed_abs, tag = 'smem constant byte address 0x4 - core index']
  #allocation1 [shape = 'u32[72,128]{1,0:T(1,128)}', space=vmem, size = 0x9000, scoped, tag = 'internal scratch']
  #allocation2 [shape = 'f32[16,32]{1,0:T(8,128)}', space=vmem, size = 0x2000, scoped, tag = 'scratch operand']
  %s0 = inlined_call_operand.vmem [shape: bf16[16,32], index: 0, kind: input, shape index: {}, may-alias: {0,5}]
  %s1 = inlined_call_operand.vmem [shape: bf16[32,64], index: 1, kind: input, shape index: {}]
  %s2 = inlined_call_operand.vmem [shape: f32[1,64], index: 2, kind: input, shape index: {}]
  %s3 = inlined_call_operand.vmem [shape: bf16[64,32], index: 3, kind: input, shape index: {}]
  %s4 = inlined_call_operand.vmem [shape: f32[1,32], index: 4, kind: input, shape index: {}]
  %s5 = inlined_call_operand.vmem [shape: bf16[16,32], index: 5, kind: input, shape index: {}, may-alias: {0,5}]
  %s6 = inlined_call_operand.vmem [shape: f32[1,32], index: 6, kind: input, shape index: {}]
  %s7 = inlined_call_operand.vmem [shape: f32[1,32], index: 7, kind: input, shape index: {}]
  %s8 = inlined_call_operand.hbm [shape: f32[16,32], index: 8, kind: output, shape index: {}]
  %s9 = sld [smem:[#allocation0]]
  $region50: #{transformer_decoder_unit.15} parent=0
    _
  %s11 = ssub.s32 1, %s9
  %s12 = scalar_select 0, %s11, %s9
  $region1: #{transformer_decoder_unit.15} parent=0
    #allocation3 [shape = 'u8[8192]{0}', space=vmem, size = 0x2000, scoped, tag = 'output window, operand 0, single buffered']
    #allocation4 [shape = 's32[1]{0}', space=sflag, size = 0x4, scoped, tag = 'scoped memory for transformer_decoder_unit.15']
    %13 = vsyncpa [#allocation4], 0
    // Predicated region
    $region2: #{transformer_decoder_unit.15} parent=1 // pred_check
      _
    $region3: #{transformer_decoder_unit.15} parent=1 // pred_check_branch
      %15 = sbr.rel (0) target = $region5
    $region4: #{transformer_decoder_unit.15} parent=1 // pred_region
      _
    $region5: #{transformer_decoder_unit.15} parent=1 // pred_fallthru
      _
    // Predicated region
    $region6: #{transformer_decoder_unit.15} parent=1 // pred_check
      _
    $region7: #{transformer_decoder_unit.15} parent=1 // pred_check_branch
      %17 = sbr.rel (0) target = $region9
    $region8: #{transformer_decoder_unit.15} parent=1 // pred_region
      _
    $region9: #{transformer_decoder_unit.15} parent=1 // pred_fallthru
      _
    // Predicated region
    $region10: #{transformer_decoder_unit.15} parent=1 // pred_check
      _
    $region11: #{transformer_decoder_unit.15} parent=1 // pred_check_branch
      %19 = sbr.rel (0) target = $region13
    $region12: #{transformer_decoder_unit.15} parent=1 // pred_region
      _
    $region13: #{transformer_decoder_unit.15} parent=1 // pred_fallthru
      _
    // Predicated region
    $region14: #{transformer_decoder_unit.15} parent=1 // pred_check
      _
    $region15: #{transformer_decoder_unit.15} parent=1 // pred_check_branch
      %21 = sbr.rel (0) target = $region17
    $region16: #{transformer_decoder_unit.15} parent=1 // pred_region
      _
    $region17: #{transformer_decoder_unit.15} parent=1 // pred_fallthru
      _
    // Predicated region
    $region18: #{transformer_decoder_unit.15} parent=1 // pred_check
      _
    $region19: #{transformer_decoder_unit.15} parent=1 // pred_check_branch
      %23 = sbr.rel (0) target = $region21
    $region20: #{transformer_decoder_unit.15} parent=1 // pred_region
      _
    $region21: #{transformer_decoder_unit.15} parent=1 // pred_fallthru
      _
    // Predicated region
    $region22: #{transformer_decoder_unit.15} parent=1 // pred_check
      _
    $region23: #{transformer_decoder_unit.15} parent=1 // pred_check_branch
      %25 = sbr.rel (0) target = $region25
    $region24: #{transformer_decoder_unit.15} parent=1 // pred_region
      _
    $region25: #{transformer_decoder_unit.15} parent=1 // pred_fallthru
      _
    // Predicated region
    $region26: #{transformer_decoder_unit.15} parent=1 // pred_check
      _
    $region27: #{transformer_decoder_unit.15} parent=1 // pred_check_branch
      %27 = sbr.rel (0) target = $region29
    $region28: #{transformer_decoder_unit.15} parent=1 // pred_region
      _
    $region29: #{transformer_decoder_unit.15} parent=1 // pred_fallthru
      _
    // Predicated region
    $region30: #{transformer_decoder_unit.15} parent=1 // pred_check
      _
    $region31: #{transformer_decoder_unit.15} parent=1 // pred_check_branch
      %29 = sbr.rel (0) target = $region33
    $region32: #{transformer_decoder_unit.15} parent=1 // pred_region
      _
    $region33: #{transformer_decoder_unit.15} parent=1 // pred_fallthru
      _
    %p31 = scmp.eq.s32.totalorder 0, 0
    // Predicated region
    $region34: #{transformer_decoder_unit.15} parent=1 // pred_check
      %p32 = pneg %p31
    $region35: #{transformer_decoder_unit.15} parent=1 // pred_check_branch
      %34 = sbr.rel (%p32) target = $region37
    $region36: #{transformer_decoder_unit.15} parent=1 // pred_region
      %vm35 = vcmask 261120
      %36 = vst.msk [vmem:[#allocation2] sm:$0xff] %vm35, 0.0
      %37 = vst.msk [vmem:[#allocation2 + $0x8] sm:$0xff] %vm35, 0.0
    $region37: #{transformer_decoder_unit.15} parent=1 // pred_fallthru
      _
    %v38 = vld [vmem:[%s0] sm:$0xf]
    %v39 = vld [vmem:[%s0 + $0x4] sm:$0xf]
    %v40 = vld [vmem:[%s1] sm:$0xf]
    %v41 = vld [vmem:[%s1 + $0x4] sm:$0xf]
    %v42 = vld [vmem:[%s1 + $0x8] sm:$0xf]
    %v43 = vld [vmem:[%s1 + $0xc] sm:$0xf]
    %v44 = vld [vmem:[%s2] sm:$0x1]
    %v46 = vperm.slane %v44, 0
    %v50 = vunpack.c.l.b16 %v38
    %v51 = vunpack.c.l.b16 %v39
    %v52 = vpack.c.b16 %v51, %v50
    %v57 = vunpack.c.l.b16 %v40
    %v58 = vunpack.c.l.b16 %v41
    %v59 = vunpack.c.l.b16 %v42
    %v60 = vunpack.c.l.b16 %v43
    %v61 = vpack.c.b16 %v58, %v57
    %v62 = vpack.c.b16 %v60, %v59
    %vm65 = vcmask 261120
    %v67 = vsel %vm65, %v52, 0
    %69 = vmatpush.bf16.msra.mxu0 0
    %70 = vmatpush.bf16.msra.mxu0 0
    %71 = vmatpush.bf16.msra.mxu0 0
    %72 = vmatpush.bf16.msra.mxu0 0
    %73 = vmatpush.bf16.msra.mxu0 0
    %74 = vmatpush.bf16.msra.mxu0 0
    %75 = vmatpush.bf16.msra.mxu0 %v62
    %76 = vmatpush.bf16.msra.mxu0 %v61
    %77 = vmatmul.bf16.gmra.mxu0 %v67
    %v78 = vpop.f32.mrf.mxu0
    %v79 = vadd.f32 %v46, %v78
    %v80 = vpop.f32.mrf.mxu0
    %v81 = vadd.f32 %v46, %v80
    %82 = vdwg.mxu0
    %v83 = vmax.f32 %v79, 0.0
    %v84 = vmax.f32 %v81, 0.0
    %v85 = vld [vmem:[#allocation2] sm:$0xff]
    %v86 = vld [vmem:[#allocation2 + $0x8] sm:$0xff]
    %v87 = vpack.c.bf16 %v84, %v83
    %v88 = vld [vmem:[%s3] sm:$0xf]
    %v89 = vld [vmem:[%s3 + $0x4] sm:$0xf]
    %v90 = vld [vmem:[%s3 + $0x8] sm:$0xf]
    %v91 = vld [vmem:[%s3 + $0xc] sm:$0xf]
    %v92 = vld [vmem:[%s3 + $0x10] sm:$0xf]
    %v93 = vld [vmem:[%s3 + $0x14] sm:$0xf]
    %v94 = vld [vmem:[%s3 + $0x18] sm:$0xf]
    %v95 = vld [vmem:[%s3 + $0x1c] sm:$0xf]
    %v104 = vunpack.c.l.b16 %v88
    %v105 = vunpack.c.l.b16 %v89
    %v106 = vunpack.c.l.b16 %v90
    %v107 = vunpack.c.l.b16 %v91
    %v108 = vunpack.c.l.b16 %v92
    %v109 = vunpack.c.l.b16 %v93
    %v110 = vunpack.c.l.b16 %v94
    %v111 = vunpack.c.l.b16 %v95
    %v112 = vpack.c.b16 %v105, %v104
    %v113 = vpack.c.b16 %v107, %v106
    %v114 = vpack.c.b16 %v109, %v108
    %v115 = vpack.c.b16 %v111, %v110
    %vm120 = vcmask 523264
    %v122 = vsel %vm120, %v87, 0
    %124 = vmatpush.bf16.msra.mxu0 0
    %125 = vmatpush.bf16.msra.mxu0 0
    %126 = vmatpush.bf16.msra.mxu0 0
    %127 = vmatpush.bf16.msra.mxu0 0
    %128 = vmatpush.bf16.msra.mxu0 %v115
    %129 = vmatpush.bf16.msra.mxu0 %v114
    %130 = vmatpush.bf16.msra.mxu0 %v113
    %131 = vmatpush.bf16.msra.mxu0 %v112
    %132 = vmatmul.bf16.gmra.mxu0 %v122
    %v133 = vpop.f32.mrf.mxu0
    %v134 = vadd.f32 0.0, %v133
    %v135 = vpop.f32.mrf.mxu0
    %v136 = vadd.f32 0.0, %v135
    %137 = vdwg.mxu0
    %v138 = vadd.f32 %v85, %v134
    %v139 = vadd.f32 %v86, %v136
    %140 = vst.msk [vmem:[#allocation2] sm:$0xff] %vm65, %v138
    %141 = vst.msk [vmem:[#allocation2 + $0x8] sm:$0xff] %vm65, %v139
    // Predicated region
    $region38: #{transformer_decoder_unit.15} parent=1 // pred_check
      %p142 = pneg %p31
    $region39: #{transformer_decoder_unit.15} parent=1 // pred_check_branch
      %144 = sbr.rel (%p142) target = $region41
    $region40: #{transformer_decoder_unit.15} parent=1 // pred_region
      %v145 = vld [vmem:[#allocation2] sm:$0xff]
      %v146 = vld [vmem:[#allocation2 + $0x8] sm:$0xff]
      %v147 = vld [vmem:[%s4] sm:$0x1]
      %v149 = vperm.slane %v147, 0
      %v151 = vadd.f32 %v145, %v149
      %v152 = vadd.f32 %v146, %v149
      %v153 = vld [vmem:[%s5] sm:$0xf]
      %v154 = vld [vmem:[%s5 + $0x4] sm:$0xf]
      %v155 = vunpack.c.l.bf16 %v153
      %v156 = vunpack.c.l.bf16 %v154
      %v157 = vadd.f32 %v151, %v155
      %v158 = vadd.f32 %v152, %v156
      %v159 = vsel %vm65, %v157, 0.0
      %160 = vadd.xlane.f32.xlu0 %v159
      %v161 = vpop.xlane.xlu0 %160
      %v162 = vsel %vm65, %v158, 0.0
      %163 = vadd.xlane.f32.xlu0 %v162
      %v164 = vpop.xlane.xlu0 %163
      %v165 = vrcp.pop 32.0
      %v166 = vmul.f32 32.0, %v165
      %v167 = vsub.f32 1.0, %v166
      %v168 = vmul.f32 %v165, %v167
      %v169 = vadd.f32 %v165, %v168
      %vm170 = vweird.f32 %v165
      %v171 = vsel %vm170, %v165, %v169
      %v172 = vmul.f32 %v161, %v171
      %v173 = vmul.f32 %v164, %v171
      %v174 = vmul.f32 %v157, %v157
      %v175 = vmul.f32 %v158, %v158
      %v176 = vsel %vm65, %v174, 0.0
      %177 = vadd.xlane.f32.xlu0 %v176
      %v178 = vpop.xlane.xlu0 %177
      %v179 = vsel %vm65, %v175, 0.0
      %180 = vadd.xlane.f32.xlu0 %v179
      %v181 = vpop.xlane.xlu0 %180
      %v182 = vmul.f32 %v178, %v171
      %v183 = vmul.f32 %v181, %v171
      %v184 = vmul.f32 %v172, %v172
      %v185 = vmul.f32 %v173, %v173
      %v186 = vsub.f32 %v182, %v184
      %v187 = vsub.f32 %v183, %v185
      %v188 = vadd.f32 %v186, 1e-05
      %v189 = vadd.f32 %v187, 1e-05
      %v190 = vrsqrt.pop %v188
      %v191 = vmul.f32 %v190, %v188
      %v192 = vmul.f32 %v191, %v190
      %v193 = vmul.f32 0.5, %v192
      %v194 = vsub.f32 1.5, %v193
      %v195 = vmul.f32 %v190, %v194
      %vm196 = vweird.f32 %v188
      %vm197 = vweird.f32 %v190
      %vm198 = vmor %vm196, %vm197
      %v199 = vsel %vm198, %v190, %v195
      %v200 = vrsqrt.pop %v189
      %v201 = vmul.f32 %v200, %v189
      %v202 = vmul.f32 %v201, %v200
      %v203 = vmul.f32 0.5, %v202
      %v204 = vsub.f32 1.5, %v203
      %v205 = vmul.f32 %v200, %v204
      %vm206 = vweird.f32 %v189
      %vm207 = vweird.f32 %v200
      %vm208 = vmor %vm206, %vm207
      %v209 = vsel %vm208, %v200, %v205
      %v210 = vsub.f32 %v157, %v172
      %v211 = vsub.f32 %v158, %v173
      %v212 = vmul.f32 %v210, %v199
      %v213 = vmul.f32 %v211, %v209
      %v214 = vld [vmem:[%s6] sm:$0x1]
      %v216 = vperm.slane %v214, 0
      %v218 = vmul.f32 %v212, %v216
      %v219 = vmul.f32 %v213, %v216
      %v220 = vld [vmem:[%s7] sm:$0x1]
      %v222 = vperm.slane %v220, 0
      %v224 = vadd.f32 %v218, %v222
      %v225 = vadd.f32 %v219, %v222
      %226 = vst.msk [vmem:[#allocation3] sm:$0xff] %vm65, %v224
      %227 = vst.msk [vmem:[#allocation3 + $0x8] sm:$0xff] %vm65, %v225
    $region41: #{transformer_decoder_unit.15} parent=1 // pred_fallthru
      _
    // Predicated region
    $region42: #{transformer_decoder_unit.15} parent=1 // pred_check
      _
    $region43: #{transformer_decoder_unit.15} parent=1 // pred_check_branch
      %229 = sbr.rel (0) target = $region45
    $region44: #{transformer_decoder_unit.15} parent=1 // pred_region
      %231 = vsyncadd [#allocation4], 0
      %s232 = sshll.u32 [#allocation3], 4
      %s233 = int_to_ptr.vmem [resolvable:$true] %s232
      %s234 = sshll.u32 %s8, 4
      %s235 = int_to_ptr.hbm [resolvable:$true] %s234
      %240 = dma.vmem_to_hbm [thread:$0]  %s233, 256, %s235, [#allocation4], 128, 128, 8
    $region45: #{transformer_decoder_unit.15} parent=1 // pred_fallthru
      _
    // Predicated region
    $region46: #{transformer_decoder_unit.15} parent=1 // pred_check
      _
    $region47: #{transformer_decoder_unit.15} parent=1 // pred_check_branch
      %242 = sbr.rel (0) target = $region49
    $region48: #{transformer_decoder_unit.15} parent=1 // pred_region
      %244 = dma.done [#allocation4], 256
    $region49: #{transformer_decoder_unit.15} parent=1 // pred_fallthru
      _
    %245 = vsyncpa [#allocation4], 1

</llo_original>
